<compile_context>
chip_gen: v5e
topology: v5e:2x2
jax: 0.10.0
libtpu: 0.0.40
codegen_flags: <defaults>
</compile_context>

<pallas_src>
import numpy as np
import jax
import jax.numpy as jnp
from jax.experimental import pallas as pl
from jax.experimental.pallas import tpu as pltpu


def _affine_coupling_kernel(x_a_ref, x_b_ref,
                            w1_ref, b1_ref, w2_ref, b2_ref,
                            w3s_ref, w3t_ref, b3s_ref, b3t_ref,
                            xb_out_ref, logdet_ref):
    f32 = jnp.float32
    x = x_a_ref[...]                          # (C, L): channels on sublanes
    L = x.shape[1]

    def taps(a):
        # a[:, l-1] / a[:, l+1] with zero padding (== Conv1d padding=1).
        z = jnp.zeros((a.shape[0], 1), a.dtype)
        prev = jnp.concatenate([z, a[:, :L - 1]], axis=1)
        nxt = jnp.concatenate([a[:, 1:], z], axis=1)
        return prev, nxt

    x_prev, x_next = taps(x)

    # ---- Conv1d(C -> F, k=3, padding=1): three accumulating (F,C)@(C,L) dots
    h1 = (jnp.dot(w1_ref[0], x_prev, preferred_element_type=f32)
          + jnp.dot(w1_ref[1], x, preferred_element_type=f32)
          + jnp.dot(w1_ref[2], x_next, preferred_element_type=f32)
          + b1_ref[...])
    h1 = jnp.maximum(h1, 0.0)                 # ReLU

    # ---- Conv1d(F -> F, k=1): plain (F,F)@(F,L) matmul ----
    h2 = jnp.dot(w2_ref[...], h1, preferred_element_type=f32) + b2_ref[...]
    h2 = jnp.maximum(h2, 0.0)                 # ReLU

    h2_prev, h2_next = taps(h2)

    # ---- Conv1d(F -> 2C, k=3, padding=1), output split into log_s / t ----
    log_s = (jnp.dot(w3s_ref[0], h2_prev, preferred_element_type=f32)
             + jnp.dot(w3s_ref[1], h2, preferred_element_type=f32)
             + jnp.dot(w3s_ref[2], h2_next, preferred_element_type=f32)
             + b3s_ref[...])                  # (C, L)
    t = (jnp.dot(w3t_ref[0], h2_prev, preferred_element_type=f32)
         + jnp.dot(w3t_ref[1], h2, preferred_element_type=f32)
         + jnp.dot(w3t_ref[2], h2_next, preferred_element_type=f32)
         + b3t_ref[...])                      # (C, L)

    # ---- coupling: s = sigmoid(log_s + 2), x_b_new = (x_b + t) * s ----
    e = jnp.exp(-(log_s + 2.0))               # sigmoid(z) = 1 / (1 + e)
    s = 1.0 / (1.0 + e)
    xb_out_ref[...] = (x_b_ref[...] + t) * s

    # log(sigmoid(z)) = -log(1 + e): one reduce per batch element.
    ld = -jnp.sum(jnp.log(1.0 + e))
    logdet_ref[...] = jnp.full((1, 128), ld, dtype=f32)


def affine_coupling_forward(x_a_ncl, x_b_ncl, params):
    """x_a_ncl, x_b_ncl: (B, C, L) float32 (PyTorch NCL layout, used as-is).
    params: kernel-layout weights from `repack_params`.
    Returns (x_a, x_b_new, log_det) matching AffineCoupling.forward."""
    w1, b1, w2, b2, w3s, w3t, b3s, b3t = params
    B, C, L = x_a_ncl.shape
    F = w2.shape[0]

    x_a = x_a_ncl.astype(jnp.float32)
    x_b = x_b_ncl.astype(jnp.float32)

    xb_new, logdet_full = pl.pallas_call(
        _affine_coupling_kernel,
        out_shape=(
            jax.ShapeDtypeStruct((B, C, L), jnp.float32),
            jax.ShapeDtypeStruct((B, 1, 128), jnp.float32),
        ),
        grid_spec=pltpu.PrefetchScalarGridSpec(
            num_scalar_prefetch=0,
            grid=(B,),
            in_specs=[
                pl.BlockSpec((None, C, L), lambda b: (b, 0, 0)),    # x_a
                pl.BlockSpec((None, C, L), lambda b: (b, 0, 0)),    # x_b
                pl.BlockSpec((3, F, C), lambda b: (0, 0, 0)),       # w1 taps
                pl.BlockSpec((F, 1), lambda b: (0, 0)),             # b1
                pl.BlockSpec((F, F), lambda b: (0, 0)),             # w2
                pl.BlockSpec((F, 1), lambda b: (0, 0)),             # b2
                pl.BlockSpec((3, C, F), lambda b: (0, 0, 0)),       # w3 (log_s)
                pl.BlockSpec((3, C, F), lambda b: (0, 0, 0)),       # w3 (t)
                pl.BlockSpec((C, 1), lambda b: (0, 0)),             # b3 (log_s)
                pl.BlockSpec((C, 1), lambda b: (0, 0)),             # b3 (t)
            ],
            out_specs=[
                pl.BlockSpec((None, C, L), lambda b: (b, 0, 0)),    # x_b out
                pl.BlockSpec((None, 1, 128), lambda b: (b, 0, 0)),  # log_det
            ],
        ),
        compiler_params=pltpu.CompilerParams(
            dimension_semantics=("parallel",)),   # 2 TCs on v7x get work
    )(x_a, x_b, w1, b1, w2, b2, w3s, w3t, b3s, b3t)

    log_det = logdet_full[:, 0, 0]               # (B,)
    return x_a_ncl, xb_new, log_det


def repack_params(w1_t, b1, w2_t, b2, w3_t, b3):
    """PyTorch Conv1d layouts -> kernel layouts (done once, outside kernel)."""
    F, C, _ = w1_t.shape
    w1 = jnp.transpose(w1_t, (2, 0, 1)).astype(jnp.float32)        # (3, F, C)
    w2 = w2_t[:, :, 0].astype(jnp.float32)                         # (F, F)
    w3s = jnp.transpose(w3_t[:C], (2, 0, 1)).astype(jnp.float32)   # (3, C, F)
    w3t = jnp.transpose(w3_t[C:], (2, 0, 1)).astype(jnp.float32)   # (3, C, F)
    return (w1, b1.reshape(F, 1).astype(jnp.float32), w2,
            b2.reshape(F, 1).astype(jnp.float32),
            w3s, w3t,
            b3[:C].reshape(C, 1).astype(jnp.float32),
            b3[C:].reshape(C, 1).astype(jnp.float32))


# ---------------- pure-JAX reference (PyTorch semantics, NCL layout) ----------
def _conv1d_ref(x, w, b, padding):
    # x: (B, Cin, L), w: (Cout, Cin, K), b: (Cout,)
    B, Cin, L = x.shape
    Cout, _, K = w.shape
    xp = jnp.pad(x, ((0, 0), (0, 0), (padding, padding)))
    out = jnp.broadcast_to(b[None, :, None], (B, Cout, L)).astype(x.dtype)
    for k in range(K):
        out = out + jnp.einsum('bcl,oc->bol', xp[:, :, k:k + L], w[:, :, k])
    return out


def _forward_ref(x_a, x_b, torch_params):
    (w1t, b1, w2t, b2, w3t, b3) = torch_params
    B, C, L = x_a.shape
    h = jax.nn.relu(_conv1d_ref(x_a, w1t, b1, padding=1))
    h = jax.nn.relu(_conv1d_ref(h, w2t, b2, padding=0))
    out = _conv1d_ref(h, w3t, b3, padding=1)
    log_s, t = out[:, :C, :], out[:, C:, :]
    s = jax.nn.sigmoid(log_s + 2.0)
    x_b_new = (x_b + t) * s
    log_det = jnp.sum(jnp.log(s).reshape(B, -1), axis=1)
    return x_a, x_b_new, log_det


if __name__ == "__main__":
    B, C_in, L, F = 2, 4, 16, 128   # batch, in_channels, signal_len, n_filters

    key = jax.random.PRNGKey(0)
    ks = jax.random.split(key, 8)

    # Deterministic synthetic parameters, stored in PyTorch Conv1d layout.
    w1_t = (jax.random.normal(ks[0], (F, C_in, 3)) * 0.2).astype(jnp.float32)
    b1   = (jax.random.normal(ks[1], (F,)) * 0.1).astype(jnp.float32)
    w2_t = (jax.random.normal(ks[2], (F, F, 1)) * 0.05).astype(jnp.float32)
    b2   = (jax.random.normal(ks[3], (F,)) * 0.1).astype(jnp.float32)
    w3_t = (jax.random.normal(ks[4], (2 * C_in, F, 3)) * 0.05).astype(jnp.float32)
    b3   = (jax.random.normal(ks[5], (2 * C_in,)) * 0.1).astype(jnp.float32)

    params = repack_params(w1_t, b1, w2_t, b2, w3_t, b3)

    x_a = jax.random.normal(ks[6], (B, C_in, L), dtype=jnp.float32)
    x_b = jax.random.normal(ks[7], (B, C_in, L), dtype=jnp.float32)

    xa_out, xb_out, log_det = affine_coupling_forward(x_a, x_b, params)
    jax.block_until_ready((xa_out, xb_out, log_det))

    # Check against a pure-JAX reference of the PyTorch forward.
    xa_ref, xb_ref, ld_ref = _forward_ref(x_a, x_b, (w1_t, b1, w2_t, b2, w3_t, b3))
    np.testing.assert_allclose(np.asarray(xa_out), np.asarray(xa_ref), rtol=1e-5, atol=1e-5)
    np.testing.assert_allclose(np.asarray(xb_out), np.asarray(xb_ref), rtol=1e-4, atol=1e-4)
    np.testing.assert_allclose(np.asarray(log_det), np.asarray(ld_ref), rtol=1e-4, atol=1e-4)

    print("KERNEL_OK")
</pallas_src>

<mosaic_0001>
module attributes {stable_mosaic.version = 11 : i64} {
  func.func @_affine_coupling_kernel(%arg0: i32, %arg1: memref<1x4x16xf32, #tpu.memory_space<vmem>>, %arg2: memref<1x4x16xf32, #tpu.memory_space<vmem>>, %arg3: memref<3x128x4xf32, #tpu.memory_space<vmem>>, %arg4: memref<128x1xf32, #tpu.memory_space<vmem>>, %arg5: memref<128x128xf32, #tpu.memory_space<vmem>>, %arg6: memref<128x1xf32, #tpu.memory_space<vmem>>, %arg7: memref<3x4x128xf32, #tpu.memory_space<vmem>>, %arg8: memref<3x4x128xf32, #tpu.memory_space<vmem>>, %arg9: memref<4x1xf32, #tpu.memory_space<vmem>>, %arg10: memref<4x1xf32, #tpu.memory_space<vmem>>, %arg11: memref<1x4x16xf32, #tpu.memory_space<vmem>>, %arg12: memref<1x1x128xf32, #tpu.memory_space<vmem>>) attributes {dimension_semantics = [#tpu.dimension_semantics<parallel>], iteration_bounds = array<i64: 2>, scalar_prefetch = 0 : i64, scratch_operands = 0 : i64, tpu.core_type = #tpu.core_type<tc>, window_params = [{transform_indices = @transform_0, window_bounds = array<i64: 1, 4, 16>}, {transform_indices = @transform_1, window_bounds = array<i64: 1, 4, 16>}, {pipeline_mode = #tpu.pipeline_mode<synchronous>, transform_indices = @transform_2, window_bounds = array<i64: 3, 128, 4>}, {pipeline_mode = #tpu.pipeline_mode<synchronous>, transform_indices = @transform_3, window_bounds = array<i64: 128, 1>}, {pipeline_mode = #tpu.pipeline_mode<synchronous>, transform_indices = @transform_4, window_bounds = array<i64: 128, 128>}, {pipeline_mode = #tpu.pipeline_mode<synchronous>, transform_indices = @transform_5, window_bounds = array<i64: 128, 1>}, {pipeline_mode = #tpu.pipeline_mode<synchronous>, transform_indices = @transform_6, window_bounds = array<i64: 3, 4, 128>}, {pipeline_mode = #tpu.pipeline_mode<synchronous>, transform_indices = @transform_7, window_bounds = array<i64: 3, 4, 128>}, {pipeline_mode = #tpu.pipeline_mode<synchronous>, transform_indices = @transform_8, window_bounds = array<i64: 4, 1>}, {pipeline_mode = #tpu.pipeline_mode<synchronous>, transform_indices = @transform_9, window_bounds = array<i64: 4, 1>}, {transform_indices = @transform_10, window_bounds = array<i64: 1, 4, 16>}, {transform_indices = @transform_11, window_bounds = array<i64: 1, 1, 128>}]} {
    %c0 = arith.constant 0 : index
    %c0_0 = arith.constant 0 : index
    %c0_1 = arith.constant 0 : index
    %0 = vector.load %arg1[%c0, %c0_0, %c0_1] : memref<1x4x16xf32, #tpu.memory_space<vmem>>, vector<1x4x16xf32>
    %1 = vector.shape_cast %0 : vector<1x4x16xf32> to vector<4x16xf32>
    %cst = arith.constant 0.000000e+00 : f32
    %2 = vector.broadcast %cst : f32 to vector<4x1xf32>
    %3 = vector.extract_strided_slice %1 {offsets = [0, 0], sizes = [4, 15], strides = [1, 1]} : vector<4x16xf32> to vector<4x15xf32>
    %4 = tpu.concatenate %2, %3 in 1 : vector<4x1xf32>, vector<4x15xf32> -> vector<4x16xf32>
    %5 = vector.extract_strided_slice %1 {offsets = [0, 1], sizes = [4, 15], strides = [1, 1]} : vector<4x16xf32> to vector<4x15xf32>
    %6 = tpu.concatenate %5, %2 in 1 : vector<4x15xf32>, vector<4x1xf32> -> vector<4x16xf32>
    %c0_2 = arith.constant 0 : index
    %c0_3 = arith.constant 0 : index
    %c0_4 = arith.constant 0 : index
    %7 = vector.load %arg3[%c0_2, %c0_3, %c0_4] : memref<3x128x4xf32, #tpu.memory_space<vmem>>, vector<1x128x4xf32>
    %8 = vector.shape_cast %7 : vector<1x128x4xf32> to vector<128x4xf32>
    %cst_5 = arith.constant dense<0.000000e+00> : vector<128x16xf32>
    %9 = tpu.matmul %8, %4, %cst_5 {dimension_numbers = #tpu.dot_dimension_numbers<[1], [0], [0], [1], [0, 0, 1, 1], [], []>} : vector<128x4xf32>, vector<4x16xf32>, vector<128x16xf32> -> vector<128x16xf32>
    %c1 = arith.constant 1 : index
    %c0_6 = arith.constant 0 : index
    %c0_7 = arith.constant 0 : index
    %10 = vector.load %arg3[%c1, %c0_6, %c0_7] : memref<3x128x4xf32, #tpu.memory_space<vmem>>, vector<1x128x4xf32>
    %11 = vector.shape_cast %10 : vector<1x128x4xf32> to vector<128x4xf32>
    %cst_8 = arith.constant dense<0.000000e+00> : vector<128x16xf32>
    %12 = tpu.matmul %11, %1, %cst_8 {dimension_numbers = #tpu.dot_dimension_numbers<[1], [0], [0], [1], [0, 0, 1, 1], [], []>} : vector<128x4xf32>, vector<4x16xf32>, vector<128x16xf32> -> vector<128x16xf32>
    %13 = arith.addf %9, %12 : vector<128x16xf32>
    %c2 = arith.constant 2 : index
    %c0_9 = arith.constant 0 : index
    %c0_10 = arith.constant 0 : index
    %14 = vector.load %arg3[%c2, %c0_9, %c0_10] : memref<3x128x4xf32, #tpu.memory_space<vmem>>, vector<1x128x4xf32>
    %15 = vector.shape_cast %14 : vector<1x128x4xf32> to vector<128x4xf32>
    %cst_11 = arith.constant dense<0.000000e+00> : vector<128x16xf32>
    %16 = tpu.matmul %15, %6, %cst_11 {dimension_numbers = #tpu.dot_dimension_numbers<[1], [0], [0], [1], [0, 0, 1, 1], [], []>} : vector<128x4xf32>, vector<4x16xf32>, vector<128x16xf32> -> vector<128x16xf32>
    %17 = arith.addf %13, %16 : vector<128x16xf32>
    %c0_12 = arith.constant 0 : index
    %c0_13 = arith.constant 0 : index
    %18 = vector.load %arg4[%c0_12, %c0_13] : memref<128x1xf32, #tpu.memory_space<vmem>>, vector<128x1xf32>
    %19 = vector.broadcast %18 : vector<128x1xf32> to vector<128x16xf32>
    %20 = arith.addf %17, %19 : vector<128x16xf32>
    %cst_14 = arith.constant 0.000000e+00 : f32
    %21 = vector.broadcast %cst_14 : f32 to vector<128x16xf32>
    %22 = arith.maximumf %20, %21 : vector<128x16xf32>
    %c0_15 = arith.constant 0 : index
    %c0_16 = arith.constant 0 : index
    %23 = vector.load %arg5[%c0_15, %c0_16] : memref<128x128xf32, #tpu.memory_space<vmem>>, vector<128x128xf32>
    %cst_17 = arith.constant dense<0.000000e+00> : vector<128x16xf32>
    %24 = tpu.matmul %23, %22, %cst_17 {dimension_numbers = #tpu.dot_dimension_numbers<[1], [0], [0], [1], [0, 0, 1, 1], [], []>} : vector<128x128xf32>, vector<128x16xf32>, vector<128x16xf32> -> vector<128x16xf32>
    %c0_18 = arith.constant 0 : index
    %c0_19 = arith.constant 0 : index
    %25 = vector.load %arg6[%c0_18, %c0_19] : memref<128x1xf32, #tpu.memory_space<vmem>>, vector<128x1xf32>
    %26 = vector.broadcast %25 : vector<128x1xf32> to vector<128x16xf32>
    %27 = arith.addf %24, %26 : vector<128x16xf32>
    %cst_20 = arith.constant 0.000000e+00 : f32
    %28 = vector.broadcast %cst_20 : f32 to vector<128x16xf32>
    %29 = arith.maximumf %27, %28 : vector<128x16xf32>
    %cst_21 = arith.constant 0.000000e+00 : f32
    %30 = vector.broadcast %cst_21 : f32 to vector<128x1xf32>
    %31 = vector.extract_strided_slice %29 {offsets = [0, 0], sizes = [128, 15], strides = [1, 1]} : vector<128x16xf32> to vector<128x15xf32>
    %32 = tpu.concatenate %30, %31 in 1 : vector<128x1xf32>, vector<128x15xf32> -> vector<128x16xf32>
    %33 = vector.extract_strided_slice %29 {offsets = [0, 1], sizes = [128, 15], strides = [1, 1]} : vector<128x16xf32> to vector<128x15xf32>
    %34 = tpu.concatenate %33, %30 in 1 : vector<128x15xf32>, vector<128x1xf32> -> vector<128x16xf32>
    %c0_22 = arith.constant 0 : index
    %c0_23 = arith.constant 0 : index
    %c0_24 = arith.constant 0 : index
    %35 = vector.load %arg7[%c0_22, %c0_23, %c0_24] : memref<3x4x128xf32, #tpu.memory_space<vmem>>, vector<1x4x128xf32>
    %36 = vector.shape_cast %35 : vector<1x4x128xf32> to vector<4x128xf32>
    %cst_25 = arith.constant dense<0.000000e+00> : vector<4x16xf32>
    %37 = tpu.matmul %36, %32, %cst_25 {dimension_numbers = #tpu.dot_dimension_numbers<[1], [0], [0], [1], [0, 0, 1, 1], [], []>} : vector<4x128xf32>, vector<128x16xf32>, vector<4x16xf32> -> vector<4x16xf32>
    %c1_26 = arith.constant 1 : index
    %c0_27 = arith.constant 0 : index
    %c0_28 = arith.constant 0 : index
    %38 = vector.load %arg7[%c1_26, %c0_27, %c0_28] : memref<3x4x128xf32, #tpu.memory_space<vmem>>, vector<1x4x128xf32>
    %39 = vector.shape_cast %38 : vector<1x4x128xf32> to vector<4x128xf32>
    %cst_29 = arith.constant dense<0.000000e+00> : vector<4x16xf32>
    %40 = tpu.matmul %39, %29, %cst_29 {dimension_numbers = #tpu.dot_dimension_numbers<[1], [0], [0], [1], [0, 0, 1, 1], [], []>} : vector<4x128xf32>, vector<128x16xf32>, vector<4x16xf32> -> vector<4x16xf32>
    %41 = arith.addf %37, %40 : vector<4x16xf32>
    %c2_30 = arith.constant 2 : index
    %c0_31 = arith.constant 0 : index
    %c0_32 = arith.constant 0 : index
    %42 = vector.load %arg7[%c2_30, %c0_31, %c0_32] : memref<3x4x128xf32, #tpu.memory_space<vmem>>, vector<1x4x128xf32>
    %43 = vector.shape_cast %42 : vector<1x4x128xf32> to vector<4x128xf32>
    %cst_33 = arith.constant dense<0.000000e+00> : vector<4x16xf32>
    %44 = tpu.matmul %43, %34, %cst_33 {dimension_numbers = #tpu.dot_dimension_numbers<[1], [0], [0], [1], [0, 0, 1, 1], [], []>} : vector<4x128xf32>, vector<128x16xf32>, vector<4x16xf32> -> vector<4x16xf32>
    %45 = arith.addf %41, %44 : vector<4x16xf32>
    %c0_34 = arith.constant 0 : index
    %c0_35 = arith.constant 0 : index
    %46 = vector.load %arg9[%c0_34, %c0_35] : memref<4x1xf32, #tpu.memory_space<vmem>>, vector<4x1xf32>
    %47 = vector.broadcast %46 : vector<4x1xf32> to vector<4x16xf32>
    %48 = arith.addf %45, %47 : vector<4x16xf32>
    %c0_36 = arith.constant 0 : index
    %c0_37 = arith.constant 0 : index
    %c0_38 = arith.constant 0 : index
    %49 = vector.load %arg8[%c0_36, %c0_37, %c0_38] : memref<3x4x128xf32, #tpu.memory_space<vmem>>, vector<1x4x128xf32>
    %50 = vector.shape_cast %49 : vector<1x4x128xf32> to vector<4x128xf32>
    %cst_39 = arith.constant dense<0.000000e+00> : vector<4x16xf32>
    %51 = tpu.matmul %50, %32, %cst_39 {dimension_numbers = #tpu.dot_dimension_numbers<[1], [0], [0], [1], [0, 0, 1, 1], [], []>} : vector<4x128xf32>, vector<128x16xf32>, vector<4x16xf32> -> vector<4x16xf32>
    %c1_40 = arith.constant 1 : index
    %c0_41 = arith.constant 0 : index
    %c0_42 = arith.constant 0 : index
    %52 = vector.load %arg8[%c1_40, %c0_41, %c0_42] : memref<3x4x128xf32, #tpu.memory_space<vmem>>, vector<1x4x128xf32>
    %53 = vector.shape_cast %52 : vector<1x4x128xf32> to vector<4x128xf32>
    %cst_43 = arith.constant dense<0.000000e+00> : vector<4x16xf32>
    %54 = tpu.matmul %53, %29, %cst_43 {dimension_numbers = #tpu.dot_dimension_numbers<[1], [0], [0], [1], [0, 0, 1, 1], [], []>} : vector<4x128xf32>, vector<128x16xf32>, vector<4x16xf32> -> vector<4x16xf32>
    %55 = arith.addf %51, %54 : vector<4x16xf32>
    %c2_44 = arith.constant 2 : index
    %c0_45 = arith.constant 0 : index
    %c0_46 = arith.constant 0 : index
    %56 = vector.load %arg8[%c2_44, %c0_45, %c0_46] : memref<3x4x128xf32, #tpu.memory_space<vmem>>, vector<1x4x128xf32>
    %57 = vector.shape_cast %56 : vector<1x4x128xf32> to vector<4x128xf32>
    %cst_47 = arith.constant dense<0.000000e+00> : vector<4x16xf32>
    %58 = tpu.matmul %57, %34, %cst_47 {dimension_numbers = #tpu.dot_dimension_numbers<[1], [0], [0], [1], [0, 0, 1, 1], [], []>} : vector<4x128xf32>, vector<128x16xf32>, vector<4x16xf32> -> vector<4x16xf32>
    %59 = arith.addf %55, %58 : vector<4x16xf32>
    %c0_48 = arith.constant 0 : index
    %c0_49 = arith.constant 0 : index
    %60 = vector.load %arg10[%c0_48, %c0_49] : memref<4x1xf32, #tpu.memory_space<vmem>>, vector<4x1xf32>
    %61 = vector.broadcast %60 : vector<4x1xf32> to vector<4x16xf32>
    %62 = arith.addf %59, %61 : vector<4x16xf32>
    %cst_50 = arith.constant 2.000000e+00 : f32
    %63 = vector.broadcast %cst_50 : f32 to vector<4x16xf32>
    %64 = arith.addf %48, %63 : vector<4x16xf32>
    %cst_51 = arith.constant 0.000000e+00 : f32
    %65 = vector.broadcast %cst_51 : f32 to vector<4x16xf32>
    %66 = arith.subf %65, %64 : vector<4x16xf32>
    %67 = math.exp %66 : vector<4x16xf32>
    %cst_52 = arith.constant 1.000000e+00 : f32
    %68 = vector.broadcast %cst_52 : f32 to vector<4x16xf32>
    %69 = arith.addf %68, %67 : vector<4x16xf32>
    %cst_53 = arith.constant 1.000000e+00 : f32
    %70 = vector.broadcast %cst_53 : f32 to vector<4x16xf32>
    %71 = arith.divf %70, %69 : vector<4x16xf32>
    %c0_54 = arith.constant 0 : index
    %c0_55 = arith.constant 0 : index
    %c0_56 = arith.constant 0 : index
    %72 = vector.load %arg2[%c0_54, %c0_55, %c0_56] : memref<1x4x16xf32, #tpu.memory_space<vmem>>, vector<1x4x16xf32>
    %73 = vector.shape_cast %72 : vector<1x4x16xf32> to vector<4x16xf32>
    %74 = arith.addf %73, %62 : vector<4x16xf32>
    %75 = arith.mulf %74, %71 : vector<4x16xf32>
    %c0_57 = arith.constant 0 : index
    %c0_58 = arith.constant 0 : index
    %c0_59 = arith.constant 0 : index
    %76 = vector.load %arg11[%c0_57, %c0_58, %c0_59] : memref<1x4x16xf32, #tpu.memory_space<vmem>>, vector<1x4x16xf32>
    %77 = vector.shape_cast %76 : vector<1x4x16xf32> to vector<4x16xf32>
    %78 = vector.shape_cast %75 : vector<4x16xf32> to vector<1x4x16xf32>
    tpu.vector_store %arg11[%c0_57, %c0_58, %c0_59], %78 {strides = array<i32>} : memref<1x4x16xf32, #tpu.memory_space<vmem>>, vector<1x4x16xf32>,
    %cst_60 = arith.constant 1.000000e+00 : f32
    %79 = vector.broadcast %cst_60 : f32 to vector<4x16xf32>
    %80 = arith.addf %79, %67 : vector<4x16xf32>
    %81 = math.log %80 : vector<4x16xf32>
    %82 = vector.shape_cast %81 : vector<4x16xf32> to vector<1x4x16xf32>
    %cst_61 = arith.constant dense<0.000000e+00> : vector<1xf32>
    %83 = vector.multi_reduction <add>, %82, %cst_61 [1, 2] : vector<1x4x16xf32> to vector<1xf32>
    %84 = vector.shape_cast %83 : vector<1xf32> to vector<1x1x1xf32>
    %85 = vector.extract %84[0, 0, 0] : f32 from vector<1x1x1xf32>
    %cst_62 = arith.constant 0.000000e+00 : f32
    %86 = arith.subf %cst_62, %85 : f32
    %87 = vector.broadcast %86 : f32 to vector<1x128xf32>
    %c0_63 = arith.constant 0 : index
    %c0_64 = arith.constant 0 : index
    %c0_65 = arith.constant 0 : index
    %88 = vector.load %arg12[%c0_63, %c0_64, %c0_65] : memref<1x1x128xf32, #tpu.memory_space<vmem>>, vector<1x1x128xf32>
    %89 = vector.shape_cast %88 : vector<1x1x128xf32> to vector<1x128xf32>
    %90 = vector.shape_cast %87 : vector<1x128xf32> to vector<1x1x128xf32>
    tpu.vector_store %arg12[%c0_63, %c0_64, %c0_65], %90 {strides = array<i32>} : memref<1x1x128xf32, #tpu.memory_space<vmem>>, vector<1x1x128xf32>,
    return
  }
  func.func @transform_0(%arg0: i32) -> (i32, i32, i32) {
    %c0_i32 = arith.constant 0 : i32
    %c0_i32_0 = arith.constant 0 : i32
    %c0_i32_1 = arith.constant 0 : i32
    return %arg0, %c0_i32, %c0_i32_0 : i32, i32, i32
  }
  func.func @transform_1(%arg0: i32) -> (i32, i32, i32) {
    %c0_i32 = arith.constant 0 : i32
    %c0_i32_0 = arith.constant 0 : i32
    %c0_i32_1 = arith.constant 0 : i32
    return %arg0, %c0_i32, %c0_i32_0 : i32, i32, i32
  }
  func.func @transform_2(%arg0: i32) -> (i32, i32, i32) {
    %c0_i32 = arith.constant 0 : i32
    %c0_i32_0 = arith.constant 0 : i32
    %c0_i32_1 = arith.constant 0 : i32
    %c0_i32_2 = arith.constant 0 : i32
    return %c0_i32, %c0_i32_0, %c0_i32_1 : i32, i32, i32
  }
  func.func @transform_3(%arg0: i32) -> (i32, i32) {
    %c0_i32 = arith.constant 0 : i32
    %c0_i32_0 = arith.constant 0 : i32
    %c0_i32_1 = arith.constant 0 : i32
    return %c0_i32, %c0_i32_0 : i32, i32
  }
  func.func @transform_4(%arg0: i32) -> (i32, i32) {
    %c0_i32 = arith.constant 0 : i32
    %c0_i32_0 = arith.constant 0 : i32
    %c0_i32_1 = arith.constant 0 : i32
    return %c0_i32, %c0_i32_0 : i32, i32
  }
  func.func @transform_5(%arg0: i32) -> (i32, i32) {
    %c0_i32 = arith.constant 0 : i32
    %c0_i32_0 = arith.constant 0 : i32
    %c0_i32_1 = arith.constant 0 : i32
    return %c0_i32, %c0_i32_0 : i32, i32
  }
  func.func @transform_6(%arg0: i32) -> (i32, i32, i32) {
    %c0_i32 = arith.constant 0 : i32
    %c0_i32_0 = arith.constant 0 : i32
    %c0_i32_1 = arith.constant 0 : i32
    %c0_i32_2 = arith.constant 0 : i32
    return %c0_i32, %c0_i32_0, %c0_i32_1 : i32, i32, i32
  }
  func.func @transform_7(%arg0: i32) -> (i32, i32, i32) {
    %c0_i32 = arith.constant 0 : i32
    %c0_i32_0 = arith.constant 0 : i32
    %c0_i32_1 = arith.constant 0 : i32
    %c0_i32_2 = arith.constant 0 : i32
    return %c0_i32, %c0_i32_0, %c0_i32_1 : i32, i32, i32
  }
  func.func @transform_8(%arg0: i32) -> (i32, i32) {
    %c0_i32 = arith.constant 0 : i32
    %c0_i32_0 = arith.constant 0 : i32
    %c0_i32_1 = arith.constant 0 : i32
    return %c0_i32, %c0_i32_0 : i32, i32
  }
  func.func @transform_9(%arg0: i32) -> (i32, i32) {
    %c0_i32 = arith.constant 0 : i32
    %c0_i32_0 = arith.constant 0 : i32
    %c0_i32_1 = arith.constant 0 : i32
    return %c0_i32, %c0_i32_0 : i32, i32
  }
  func.func @transform_10(%arg0: i32) -> (i32, i32, i32) {
    %c0_i32 = arith.constant 0 : i32
    %c0_i32_0 = arith.constant 0 : i32
    %c0_i32_1 = arith.constant 0 : i32
    return %arg0, %c0_i32, %c0_i32_0 : i32, i32, i32
  }
  func.func @transform_11(%arg0: i32) -> (i32, i32, i32) {
    %c0_i32 = arith.constant 0 : i32
    %c0_i32_0 = arith.constant 0 : i32
    %c0_i32_1 = arith.constant 0 : i32
    return %arg0, %c0_i32, %c0_i32_0 : i32, i32, i32
  }
}

</mosaic_0001>

<llo_original>
// kernel: tpu_custom_call.1
$region0: #{tpu_custom_call.1}
  #allocation0 [shape = 'u32[]', space=smem, size = 0x4, offset = 0x4, fixed_abs, tag = 'smem constant byte address 0x4 - core index']
  #allocation1 [shape = 'u32[72,128]{1,0:T(1,128)}', space=vmem, size = 0x9000, scoped, tag = 'internal scratch']
  %s0 = inlined_call_operand.vmem [shape: f32[2,4,16], index: 0, kind: input, shape index: {}]
  %s1 = inlined_call_operand.vmem [shape: f32[2,4,16], index: 1, kind: input, shape index: {}]
  %s2 = inlined_call_operand.vmem [shape: f32[3,128,4], index: 2, kind: input, shape index: {}]
  %s3 = inlined_call_operand.vmem [shape: f32[128,1], index: 3, kind: input, shape index: {}]
  %s4 = inlined_call_operand.vmem [shape: f32[128,128], index: 4, kind: input, shape index: {}]
  %s5 = inlined_call_operand.vmem [shape: f32[128,1], index: 5, kind: input, shape index: {}]
  %s6 = inlined_call_operand.vmem [shape: f32[3,4,128], index: 6, kind: input, shape index: {}]
  %s7 = inlined_call_operand.vmem [shape: f32[3,4,128], index: 7, kind: input, shape index: {}]
  %s8 = inlined_call_operand.vmem [shape: f32[4,1], index: 8, kind: input, shape index: {}]
  %s9 = inlined_call_operand.vmem [shape: f32[4,1], index: 9, kind: input, shape index: {}]
  %s10 = inlined_call_operand.hbm [shape: f32[2,4,16], index: 10, kind: output, shape index: {0}]
  %s11 = inlined_call_operand.hbm [shape: f32[2,1,128], index: 11, kind: output, shape index: {1}]
  %12 = xla_tuple %s10, %s11
  %s13 = sld [smem:[#allocation0]]
  $region81: #{tpu_custom_call.1} parent=0
    _
  %s15 = ssub.s32 1, %s13
  %s16 = scalar_select 0, %s15, %s13
  $region1: #{tpu_custom_call.1} parent=0
    #allocation2 [shape = 'u8[4096]{0}', space=vmem, size = 0x1000, scoped, tag = 'output window, operand 0']
    #allocation3 [shape = 's32[2]{0}', space=sflag, size = 0x8, scoped, tag = 'scoped memory for tpu_custom_call.1']
    #allocation4 [shape = 'u8[1024]{0}', space=vmem, size = 0x400, scoped, tag = 'output window, operand 1']
    #allocation5 [shape = 's32[2]{0}', space=sflag, size = 0x8, scoped, tag = 'scoped memory for tpu_custom_call.1']
    %17 = vsyncpa [#allocation3], 0
    %s18 = scalar_lea.sflag [#allocation3], 1
    %19 = vsyncpa %s18, 0
    %20 = vsyncpa [#allocation5], 0
    %s21 = scalar_lea.sflag [#allocation5], 1
    %22 = vsyncpa %s21, 0
    loop: start=0, step=1, limit=4
    $region2: #{tpu_custom_call.1} parent=1 // loop_pre_header
      _
    $region3: #{tpu_custom_call.1} parent=1 // loop_header
      %s24 = sphi 0, %s28
      %p25 = scmp.ge.s32.totalorder %s24, 4
      %s34 = sphi 0, %s36
      %s37 = sphi 0, %s34
      %s38 = sphi 0, %s37
      %s54 = sphi 0, %s38
      %s60 = sphi 0, %s62
      %s63 = sphi 0, %s60
      %s64 = sphi 0, %s63
      %s80 = sphi 0, %s64
      %s84 = sphi 0, %s84
      %s86 = sphi 0, %s84
      %s87 = sphi 0, %s86
      %s101 = sphi 0, %s87
      %s105 = sphi 0, %s105
      %s107 = sphi 0, %s105
      %s108 = sphi 0, %s107
      %s122 = sphi 0, %s108
      %s126 = sphi 0, %s126
      %s128 = sphi 0, %s126
      %s129 = sphi 0, %s128
      %s143 = sphi 0, %s129
      %s147 = sphi 0, %s147
      %s149 = sphi 0, %s147
      %s150 = sphi 0, %s149
      %s164 = sphi 0, %s150
      %s168 = sphi 0, %s168
      %s170 = sphi 0, %s168
      %s171 = sphi 0, %s170
      %s185 = sphi 0, %s171
      %s189 = sphi 0, %s189
      %s191 = sphi 0, %s189
      %s192 = sphi 0, %s191
      %s206 = sphi 0, %s192
      %s210 = sphi 0, %s210
      %s212 = sphi 0, %s210
      %s213 = sphi 0, %s212
      %s227 = sphi 0, %s213
      %s231 = sphi 0, %s231
      %s233 = sphi 0, %s231
      %s234 = sphi 0, %s233
      %s248 = sphi 0, %s234
      %s254 = sphi 0, %s256
      %s257 = sphi 0, %s254
      %s258 = sphi 0, %s257
      %s274 = sphi 0, %s258
      %s280 = sphi 0, %s282
      %s283 = sphi 0, %s280
      %s284 = sphi 0, %s283
      %s300 = sphi 0, %s284
    $region4: #{tpu_custom_call.1} parent=1 // loop_header_branch
      %27 = sbr.rel (%p25) target = $region8
    $region5: #{tpu_custom_call.1} parent=1 // loop_body
      %s29 = ssub.s32 %s24, 1
      %s30 = ssub.s32 %s24, 2
      %s31 = sadd.s32 %s24, 1
      %s32 = ssub.s32 %s24, %s31
      %p33 = scmp.eq.s32.totalorder %s32, 0
      %s35 = sadd.s32 %s34, 1
      %s36 = scalar_select %p33, %s34, %s35
      %p39 = pneg %p33
      %p40 = scmp.eq.s32.totalorder %s24, 1
      %p41 = por %p39, %p40
      %p42 = scmp.ne.s32.totalorder %s34, %s37
      %p43 = scmp.eq.s32.totalorder %s24, 0
      %p44 = por %p42, %p43
      %p45 = scmp.ne.s32.totalorder %s34, %s37
      %p46 = scmp.eq.s32.totalorder %s29, 1
      %p47 = por %p45, %p46
      %p48 = scmp.ne.s32.totalorder %s37, %s38
      %p49 = scmp.eq.s32.totalorder %s29, 0
      %p50 = por %p48, %p49
      %p51 = scmp.ne.s32.totalorder %s37, %s38
      %p52 = scmp.eq.s32.totalorder %s30, 1
      %p53 = por %p51, %p52
      %p55 = scmp.ne.s32.totalorder %s38, %s54
      %p56 = scmp.eq.s32.totalorder %s30, 0
      %p57 = por %p55, %p56
      %s58 = ssub.s32 %s24, %s31
      %p59 = scmp.eq.s32.totalorder %s58, 0
      %s61 = sadd.s32 %s60, 1
      %s62 = scalar_select %p59, %s60, %s61
      %p65 = pneg %p59
      %p66 = scmp.eq.s32.totalorder %s24, 1
      %p67 = por %p65, %p66
      %p68 = scmp.ne.s32.totalorder %s60, %s63
      %p69 = scmp.eq.s32.totalorder %s24, 0
      %p70 = por %p68, %p69
      %p71 = scmp.ne.s32.totalorder %s60, %s63
      %p72 = scmp.eq.s32.totalorder %s29, 1
      %p73 = por %p71, %p72
      %p74 = scmp.ne.s32.totalorder %s63, %s64
      %p75 = scmp.eq.s32.totalorder %s29, 0
      %p76 = por %p74, %p75
      %p77 = scmp.ne.s32.totalorder %s63, %s64
      %p78 = scmp.eq.s32.totalorder %s30, 1
      %p79 = por %p77, %p78
      %p81 = scmp.ne.s32.totalorder %s64, %s80
      %p82 = scmp.eq.s32.totalorder %s30, 0
      %p83 = por %p81, %p82
      %s85 = sadd.s32 %s84, 1
      %p88 = scmp.eq.s32.totalorder %s24, 1
      %p89 = scmp.ne.s32.totalorder %s84, %s86
      %p90 = scmp.eq.s32.totalorder %s24, 0
      %p91 = por %p89, %p90
      %p92 = scmp.ne.s32.totalorder %s84, %s86
      %p93 = scmp.eq.s32.totalorder %s29, 1
      %p94 = por %p92, %p93
      %p95 = scmp.ne.s32.totalorder %s86, %s87
      %p96 = scmp.eq.s32.totalorder %s29, 0
      %p97 = por %p95, %p96
      %p98 = scmp.ne.s32.totalorder %s86, %s87
      %p99 = scmp.eq.s32.totalorder %s30, 1
      %p100 = por %p98, %p99
      %p102 = scmp.ne.s32.totalorder %s87, %s101
      %p103 = scmp.eq.s32.totalorder %s30, 0
      %p104 = por %p102, %p103
      %s106 = sadd.s32 %s105, 1
      %p109 = scmp.eq.s32.totalorder %s24, 1
      %p110 = scmp.ne.s32.totalorder %s105, %s107
      %p111 = scmp.eq.s32.totalorder %s24, 0
      %p112 = por %p110, %p111
      %p113 = scmp.ne.s32.totalorder %s105, %s107
      %p114 = scmp.eq.s32.totalorder %s29, 1
      %p115 = por %p113, %p114
      %p116 = scmp.ne.s32.totalorder %s107, %s108
      %p117 = scmp.eq.s32.totalorder %s29, 0
      %p118 = por %p116, %p117
      %p119 = scmp.ne.s32.totalorder %s107, %s108
      %p120 = scmp.eq.s32.totalorder %s30, 1
      %p121 = por %p119, %p120
      %p123 = scmp.ne.s32.totalorder %s108, %s122
      %p124 = scmp.eq.s32.totalorder %s30, 0
      %p125 = por %p123, %p124
      %s127 = sadd.s32 %s126, 1
      %p130 = scmp.eq.s32.totalorder %s24, 1
      %p131 = scmp.ne.s32.totalorder %s126, %s128
      %p132 = scmp.eq.s32.totalorder %s24, 0
      %p133 = por %p131, %p132
      %p134 = scmp.ne.s32.totalorder %s126, %s128
      %p135 = scmp.eq.s32.totalorder %s29, 1
      %p136 = por %p134, %p135
      %p137 = scmp.ne.s32.totalorder %s128, %s129
      %p138 = scmp.eq.s32.totalorder %s29, 0
      %p139 = por %p137, %p138
      %p140 = scmp.ne.s32.totalorder %s128, %s129
      %p141 = scmp.eq.s32.totalorder %s30, 1
      %p142 = por %p140, %p141
      %p144 = scmp.ne.s32.totalorder %s129, %s143
      %p145 = scmp.eq.s32.totalorder %s30, 0
      %p146 = por %p144, %p145
      %s148 = sadd.s32 %s147, 1
      %p151 = scmp.eq.s32.totalorder %s24, 1
      %p152 = scmp.ne.s32.totalorder %s147, %s149
      %p153 = scmp.eq.s32.totalorder %s24, 0
      %p154 = por %p152, %p153
      %p155 = scmp.ne.s32.totalorder %s147, %s149
      %p156 = scmp.eq.s32.totalorder %s29, 1
      %p157 = por %p155, %p156
      %p158 = scmp.ne.s32.totalorder %s149, %s150
      %p159 = scmp.eq.s32.totalorder %s29, 0
      %p160 = por %p158, %p159
      %p161 = scmp.ne.s32.totalorder %s149, %s150
      %p162 = scmp.eq.s32.totalorder %s30, 1
      %p163 = por %p161, %p162
      %p165 = scmp.ne.s32.totalorder %s150, %s164
      %p166 = scmp.eq.s32.totalorder %s30, 0
      %p167 = por %p165, %p166
      %s169 = sadd.s32 %s168, 1
      %p172 = scmp.eq.s32.totalorder %s24, 1
      %p173 = scmp.ne.s32.totalorder %s168, %s170
      %p174 = scmp.eq.s32.totalorder %s24, 0
      %p175 = por %p173, %p174
      %p176 = scmp.ne.s32.totalorder %s168, %s170
      %p177 = scmp.eq.s32.totalorder %s29, 1
      %p178 = por %p176, %p177
      %p179 = scmp.ne.s32.totalorder %s170, %s171
      %p180 = scmp.eq.s32.totalorder %s29, 0
      %p181 = por %p179, %p180
      %p182 = scmp.ne.s32.totalorder %s170, %s171
      %p183 = scmp.eq.s32.totalorder %s30, 1
      %p184 = por %p182, %p183
      %p186 = scmp.ne.s32.totalorder %s171, %s185
      %p187 = scmp.eq.s32.totalorder %s30, 0
      %p188 = por %p186, %p187
      %s190 = sadd.s32 %s189, 1
      %p193 = scmp.eq.s32.totalorder %s24, 1
      %p194 = scmp.ne.s32.totalorder %s189, %s191
      %p195 = scmp.eq.s32.totalorder %s24, 0
      %p196 = por %p194, %p195
      %p197 = scmp.ne.s32.totalorder %s189, %s191
      %p198 = scmp.eq.s32.totalorder %s29, 1
      %p199 = por %p197, %p198
      %p200 = scmp.ne.s32.totalorder %s191, %s192
      %p201 = scmp.eq.s32.totalorder %s29, 0
      %p202 = por %p200, %p201
      %p203 = scmp.ne.s32.totalorder %s191, %s192
      %p204 = scmp.eq.s32.totalorder %s30, 1
      %p205 = por %p203, %p204
      %p207 = scmp.ne.s32.totalorder %s192, %s206
      %p208 = scmp.eq.s32.totalorder %s30, 0
      %p209 = por %p207, %p208
      %s211 = sadd.s32 %s210, 1
      %p214 = scmp.eq.s32.totalorder %s24, 1
      %p215 = scmp.ne.s32.totalorder %s210, %s212
      %p216 = scmp.eq.s32.totalorder %s24, 0
      %p217 = por %p215, %p216
      %p218 = scmp.ne.s32.totalorder %s210, %s212
      %p219 = scmp.eq.s32.totalorder %s29, 1
      %p220 = por %p218, %p219
      %p221 = scmp.ne.s32.totalorder %s212, %s213
      %p222 = scmp.eq.s32.totalorder %s29, 0
      %p223 = por %p221, %p222
      %p224 = scmp.ne.s32.totalorder %s212, %s213
      %p225 = scmp.eq.s32.totalorder %s30, 1
      %p226 = por %p224, %p225
      %p228 = scmp.ne.s32.totalorder %s213, %s227
      %p229 = scmp.eq.s32.totalorder %s30, 0
      %p230 = por %p228, %p229
      %s232 = sadd.s32 %s231, 1
      %p235 = scmp.eq.s32.totalorder %s24, 1
      %p236 = scmp.ne.s32.totalorder %s231, %s233
      %p237 = scmp.eq.s32.totalorder %s24, 0
      %p238 = por %p236, %p237
      %p239 = scmp.ne.s32.totalorder %s231, %s233
      %p240 = scmp.eq.s32.totalorder %s29, 1
      %p241 = por %p239, %p240
      %p242 = scmp.ne.s32.totalorder %s233, %s234
      %p243 = scmp.eq.s32.totalorder %s29, 0
      %p244 = por %p242, %p243
      %p245 = scmp.ne.s32.totalorder %s233, %s234
      %p246 = scmp.eq.s32.totalorder %s30, 1
      %p247 = por %p245, %p246
      %p249 = scmp.ne.s32.totalorder %s234, %s248
      %p250 = scmp.eq.s32.totalorder %s30, 0
      %p251 = por %p249, %p250
      %s252 = ssub.s32 %s24, %s31
      %p253 = scmp.eq.s32.totalorder %s252, 0
      %s255 = sadd.s32 %s254, 1
      %s256 = scalar_select %p253, %s254, %s255
      %p259 = pneg %p253
      %p260 = scmp.eq.s32.totalorder %s24, 1
      %p261 = por %p259, %p260
      %p262 = scmp.ne.s32.totalorder %s254, %s257
      %p263 = scmp.eq.s32.totalorder %s24, 0
      %p264 = por %p262, %p263
      %p265 = scmp.ne.s32.totalorder %s254, %s257
      %p266 = scmp.eq.s32.totalorder %s29, 1
      %p267 = por %p265, %p266
      %p268 = scmp.ne.s32.totalorder %s257, %s258
      %p269 = scmp.eq.s32.totalorder %s29, 0
      %p270 = por %p268, %p269
      %p271 = scmp.ne.s32.totalorder %s257, %s258
      %p272 = scmp.eq.s32.totalorder %s30, 1
      %p273 = por %p271, %p272
      %p275 = scmp.ne.s32.totalorder %s258, %s274
      %p276 = scmp.eq.s32.totalorder %s30, 0
      %p277 = por %p275, %p276
      %s278 = ssub.s32 %s24, %s31
      %p279 = scmp.eq.s32.totalorder %s278, 0
      %s281 = sadd.s32 %s280, 1
      %s282 = scalar_select %p279, %s280, %s281
      %p285 = pneg %p279
      %p286 = scmp.eq.s32.totalorder %s24, 1
      %p287 = por %p285, %p286
      %p288 = scmp.ne.s32.totalorder %s280, %s283
      %p289 = scmp.eq.s32.totalorder %s24, 0
      %p290 = por %p288, %p289
      %p291 = scmp.ne.s32.totalorder %s280, %s283
      %p292 = scmp.eq.s32.totalorder %s29, 1
      %p293 = por %p291, %p292
      %p294 = scmp.ne.s32.totalorder %s283, %s284
      %p295 = scmp.eq.s32.totalorder %s29, 0
      %p296 = por %p294, %p295
      %p297 = scmp.ne.s32.totalorder %s283, %s284
      %p298 = scmp.eq.s32.totalorder %s30, 1
      %p299 = por %p297, %p298
      %p301 = scmp.ne.s32.totalorder %s284, %s300
      %p302 = scmp.eq.s32.totalorder %s30, 0
      %p303 = por %p301, %p302
      %p304 = scmp.le.s32.totalorder 1, %s24
      %p305 = scmp.lt.s32.totalorder %s24, 3
      %p306 = pnand %p304, %p305
      %p307 = pneg %p306
      // Predicated region
      $region9: #{tpu_custom_call.1} parent=5 // pred_check
        _
      $region10: #{tpu_custom_call.1} parent=5 // pred_check_branch
        %309 = sbr.rel (%p306) target = $region12
      $region11: #{tpu_custom_call.1} parent=5 // pred_region
        %s310 = ssub.s32 %s24, 1
        // Predicated region
        $region13: #{tpu_custom_call.1} parent=11 // pred_check
          %p311 = pneg %p97
        $region14: #{tpu_custom_call.1} parent=11 // pred_check_branch
          %313 = sbr.rel (%p311) target = $region16
        $region15: #{tpu_custom_call.1} parent=11 // pred_region
          _
        $region16: #{tpu_custom_call.1} parent=11 // pred_fallthru
          _
        // Predicated region
        $region17: #{tpu_custom_call.1} parent=11 // pred_check
          %p314 = pneg %p118
        $region18: #{tpu_custom_call.1} parent=11 // pred_check_branch
          %316 = sbr.rel (%p314) target = $region20
        $region19: #{tpu_custom_call.1} parent=11 // pred_region
          _
        $region20: #{tpu_custom_call.1} parent=11 // pred_fallthru
          _
        // Predicated region
        $region21: #{tpu_custom_call.1} parent=11 // pred_check
          %p317 = pneg %p139
        $region22: #{tpu_custom_call.1} parent=11 // pred_check_branch
          %319 = sbr.rel (%p317) target = $region24
        $region23: #{tpu_custom_call.1} parent=11 // pred_region
          _
        $region24: #{tpu_custom_call.1} parent=11 // pred_fallthru
          _
        // Predicated region
        $region25: #{tpu_custom_call.1} parent=11 // pred_check
          %p320 = pneg %p160
        $region26: #{tpu_custom_call.1} parent=11 // pred_check_branch
          %322 = sbr.rel (%p320) target = $region28
        $region27: #{tpu_custom_call.1} parent=11 // pred_region
          _
        $region28: #{tpu_custom_call.1} parent=11 // pred_fallthru
          _
        // Predicated region
        $region29: #{tpu_custom_call.1} parent=11 // pred_check
          %p323 = pneg %p181
        $region30: #{tpu_custom_call.1} parent=11 // pred_check_branch
          %325 = sbr.rel (%p323) target = $region32
        $region31: #{tpu_custom_call.1} parent=11 // pred_region
          _
        $region32: #{tpu_custom_call.1} parent=11 // pred_fallthru
          _
        // Predicated region
        $region33: #{tpu_custom_call.1} parent=11 // pred_check
          %p326 = pneg %p202
        $region34: #{tpu_custom_call.1} parent=11 // pred_check_branch
          %328 = sbr.rel (%p326) target = $region36
        $region35: #{tpu_custom_call.1} parent=11 // pred_region
          _
        $region36: #{tpu_custom_call.1} parent=11 // pred_fallthru
          _
        // Predicated region
        $region37: #{tpu_custom_call.1} parent=11 // pred_check
          %p329 = pneg %p223
        $region38: #{tpu_custom_call.1} parent=11 // pred_check_branch
          %331 = sbr.rel (%p329) target = $region40
        $region39: #{tpu_custom_call.1} parent=11 // pred_region
          _
        $region40: #{tpu_custom_call.1} parent=11 // pred_fallthru
          _
        // Predicated region
        $region41: #{tpu_custom_call.1} parent=11 // pred_check
          %p332 = pneg %p244
        $region42: #{tpu_custom_call.1} parent=11 // pred_check_branch
          %334 = sbr.rel (%p332) target = $region44
        $region43: #{tpu_custom_call.1} parent=11 // pred_region
          _
        $region44: #{tpu_custom_call.1} parent=11 // pred_fallthru
          _
      $region12: #{tpu_custom_call.1} parent=5 // pred_fallthru
        _
      %p335 = scmp.lt.s32.totalorder %s24, 2
      // Predicated region
      $region45: #{tpu_custom_call.1} parent=5 // pred_check
        %p336 = pneg %p335
      $region46: #{tpu_custom_call.1} parent=5 // pred_check_branch
        %338 = sbr.rel (%p336) target = $region48
      $region47: #{tpu_custom_call.1} parent=5 // pred_region
        // Predicated region
        $region49: #{tpu_custom_call.1} parent=47 // pred_check
          %p339 = pneg %p44
        $region50: #{tpu_custom_call.1} parent=47 // pred_check_branch
          %341 = sbr.rel (%p339) target = $region52
        $region51: #{tpu_custom_call.1} parent=47 // pred_region
          %p342 = scmp.lt.s32.totalorder %s24, 1
          %s343 = scalar_select %p342, %s24, 1
          %s344 = smul.addr %s343, 4
          %s345 = scalar_lea.vmem %s0, %s344
        $region52: #{tpu_custom_call.1} parent=47 // pred_fallthru
          _
        // Predicated region
        $region53: #{tpu_custom_call.1} parent=47 // pred_check
          %p346 = pneg %p70
        $region54: #{tpu_custom_call.1} parent=47 // pred_check_branch
          %348 = sbr.rel (%p346) target = $region56
        $region55: #{tpu_custom_call.1} parent=47 // pred_region
          %p349 = scmp.lt.s32.totalorder %s24, 1
          %s350 = scalar_select %p349, %s24, 1
          %s351 = smul.addr %s350, 4
          %s352 = scalar_lea.vmem %s1, %s351
        $region56: #{tpu_custom_call.1} parent=47 // pred_fallthru
          _
      $region48: #{tpu_custom_call.1} parent=5 // pred_fallthru
        _
      %p353 = scmp.le.s32.totalorder 1, %s24
      %p354 = scmp.lt.s32.totalorder %s24, 3
      %p355 = pnand %p353, %p354
      %p356 = pneg %p355
      // Predicated region
      $region57: #{tpu_custom_call.1} parent=5 // pred_check
        _
      $region58: #{tpu_custom_call.1} parent=5 // pred_check_branch
        %358 = sbr.rel (%p355) target = $region60
      $region59: #{tpu_custom_call.1} parent=5 // pred_region
        %s359 = ssub.s32 %s24, 1
        %p360 = scmp.lt.s32.totalorder %s29, 1
        %s361 = scalar_select %p360, %s29, 1
        %s362 = smul.addr %s361, 4
        %s363 = scalar_lea.vmem %s0, %s362
        %p364 = pneg %p50
        %p365 = pneg %p47
        %p366 = scmp.lt.s32.totalorder %s29, 1
        %s367 = scalar_select %p366, %s29, 1
        %s368 = smul.addr %s367, 4
        %s369 = scalar_lea.vmem %s1, %s368
        %p370 = pneg %p76
        %p371 = pneg %p73
        %p372 = pneg %p97
        %p373 = pneg %p94
        %p374 = pneg %p118
        %p375 = pneg %p115
        %p376 = pneg %p139
        %p377 = pneg %p136
        %p378 = pneg %p160
        %p379 = pneg %p157
        %p380 = pneg %p181
        %p381 = pneg %p178
        %p382 = pneg %p202
        %p383 = pneg %p199
        %p384 = pneg %p223
        %p385 = pneg %p220
        %p386 = pneg %p244
        %p387 = pneg %p241
        %p388 = pneg %p270
        %p389 = pneg %p267
        %s390 = sand.u32 %s257, 1
        %s391 = scalar_lea.sflag [#allocation3], %s390
        %s392 = sand.u32 %s257, 1
        %s393 = smul.addr %s392, 4
        %s394 = scalar_lea.vmem [#allocation2], %s393
        %p395 = pneg %p296
        %p396 = pneg %p293
        %s397 = sand.u32 %s283, 1
        %s398 = scalar_lea.sflag [#allocation5], %s397
        %s399 = sand.u32 %s283, 1
        %s400 = scalar_lea.vmem [#allocation4], %s399
        %p401 = scmp.lt.s32.totalorder %s29, 1
        %s402 = scalar_select %p401, %s29, 1
        %s403 = smul.addr %s402, 4
        %s404 = scalar_lea.vmem %s0, %s403
        %p405 = scmp.lt.s32.totalorder %s29, 1
        %s406 = scalar_select %p405, %s29, 1
        %s407 = smul.addr %s406, 4
        %s408 = scalar_lea.vmem %s1, %s407
        %v409 = vld [vmem:[%s404] sm:$0xf]
        %411 = vrot.lane.b32.xlu0 %v409, 1
        %v412 = vpop.permute.xlu0 %411
        %vm414 = vcmask 7168
        %v415 = vsel %vm414, 0.0, %v412
        %416 = vrot.lane.b32.xlu0 %v409, 127
        %v417 = vpop.permute.xlu0 %416
        %vm419 = vcmask 121856
        %v420 = vsel %vm419, %v417, 0.0
        %v421 = vld [vmem:[%s2] sm:$0xff]
        %v422 = vld [vmem:[%s2 + $0x8] sm:$0xff]
        %v423 = vld [vmem:[%s2 + $0x10] sm:$0xff]
        %v424 = vld [vmem:[%s2 + $0x18] sm:$0xff]
        %v425 = vld [vmem:[%s2 + $0x20] sm:$0xff]
        %v426 = vld [vmem:[%s2 + $0x28] sm:$0xff]
        %v427 = vld [vmem:[%s2 + $0x30] sm:$0xff]
        %v428 = vld [vmem:[%s2 + $0x38] sm:$0xff]
        %v429 = vld [vmem:[%s2 + $0x40] sm:$0xff]
        %v430 = vld [vmem:[%s2 + $0x48] sm:$0xff]
        %v431 = vld [vmem:[%s2 + $0x50] sm:$0xff]
        %v432 = vld [vmem:[%s2 + $0x58] sm:$0xff]
        %v433 = vld [vmem:[%s2 + $0x60] sm:$0xff]
        %v434 = vld [vmem:[%s2 + $0x68] sm:$0xff]
        %v435 = vld [vmem:[%s2 + $0x70] sm:$0xff]
        %v436 = vld [vmem:[%s2 + $0x78] sm:$0xff]
        %s437 = scalar_lea.vmem %s2, 128
        %v438 = vld [vmem:[%s437] sm:$0xff]
        %v439 = vld [vmem:[%s437 + $0x8] sm:$0xff]
        %v440 = vld [vmem:[%s437 + $0x10] sm:$0xff]
        %v441 = vld [vmem:[%s437 + $0x18] sm:$0xff]
        %v442 = vld [vmem:[%s437 + $0x20] sm:$0xff]
        %v443 = vld [vmem:[%s437 + $0x28] sm:$0xff]
        %v444 = vld [vmem:[%s437 + $0x30] sm:$0xff]
        %v445 = vld [vmem:[%s437 + $0x38] sm:$0xff]
        %v446 = vld [vmem:[%s437 + $0x40] sm:$0xff]
        %v447 = vld [vmem:[%s437 + $0x48] sm:$0xff]
        %v448 = vld [vmem:[%s437 + $0x50] sm:$0xff]
        %v449 = vld [vmem:[%s437 + $0x58] sm:$0xff]
        %v450 = vld [vmem:[%s437 + $0x60] sm:$0xff]
        %v451 = vld [vmem:[%s437 + $0x68] sm:$0xff]
        %v452 = vld [vmem:[%s437 + $0x70] sm:$0xff]
        %v453 = vld [vmem:[%s437 + $0x78] sm:$0xff]
        %vm454 = vcmask 31744
        %v456 = vsel %vm454, %v438, 0
        %v459 = vsel %vm454, %v439, 0
        %v462 = vsel %vm454, %v440, 0
        %v465 = vsel %vm454, %v441, 0
        %v468 = vsel %vm454, %v442, 0
        %v471 = vsel %vm454, %v443, 0
        %v474 = vsel %vm454, %v444, 0
        %v477 = vsel %vm454, %v445, 0
        %v480 = vsel %vm454, %v446, 0
        %v483 = vsel %vm454, %v447, 0
        %v486 = vsel %vm454, %v448, 0
        %v489 = vsel %vm454, %v449, 0
        %v492 = vsel %vm454, %v450, 0
        %v495 = vsel %vm454, %v451, 0
        %v498 = vsel %vm454, %v452, 0
        %v501 = vsel %vm454, %v453, 0
        %vm503 = vcmask 1043456
        %v504 = vsel %vm503, %v409, 0
        %506 = vmatpush.msra.mxu0 0.0
        %507 = vmatpush.msra.mxu0 0.0
        %508 = vmatpush.msra.mxu0 0.0
        %509 = vmatpush.msra.mxu0 0.0
        %510 = vmatpush.msra.mxu0 0.0
        %511 = vmatpush.msra.mxu0 0.0
        %512 = vmatpush.msra.mxu0 0.0
        %513 = vmatpush.msra.mxu0 0.0
        %514 = vmatpush.msra.mxu0 0.0
        %515 = vmatpush.msra.mxu0 0.0
        %516 = vmatpush.msra.mxu0 0.0
        %517 = vmatpush.msra.mxu0 0.0
        %518 = vmatpush.msra.mxu0 0.0
        %519 = vmatpush.msra.mxu0 0.0
        %520 = vmatpush.msra.mxu0 0.0
        %521 = vmatpush.msra.mxu0 %v504
        %522 = vmatmul.f32.gmra.mxu0 %v456
        %v523 = vpop.f32.mrf.mxu0
        %v524 = vadd.f32 0.0, %v523
        %525 = vmatmul.f32.gmra.mxu0 %v459
        %v526 = vpop.f32.mrf.mxu0
        %v527 = vadd.f32 0.0, %v526
        %528 = vmatmul.f32.gmra.mxu0 %v462
        %v529 = vpop.f32.mrf.mxu0
        %v530 = vadd.f32 0.0, %v529
        %531 = vmatmul.f32.gmra.mxu0 %v465
        %v532 = vpop.f32.mrf.mxu0
        %v533 = vadd.f32 0.0, %v532
        %534 = vmatmul.f32.gmra.mxu0 %v468
        %v535 = vpop.f32.mrf.mxu0
        %v536 = vadd.f32 0.0, %v535
        %537 = vmatmul.f32.gmra.mxu0 %v471
        %v538 = vpop.f32.mrf.mxu0
        %v539 = vadd.f32 0.0, %v538
        %540 = vmatmul.f32.gmra.mxu0 %v474
        %v541 = vpop.f32.mrf.mxu0
        %v542 = vadd.f32 0.0, %v541
        %543 = vmatmul.f32.gmra.mxu0 %v477
        %v544 = vpop.f32.mrf.mxu0
        %v545 = vadd.f32 0.0, %v544
        %546 = vmatmul.f32.gmra.mxu0 %v480
        %v547 = vpop.f32.mrf.mxu0
        %v548 = vadd.f32 0.0, %v547
        %549 = vmatmul.f32.gmra.mxu0 %v483
        %v550 = vpop.f32.mrf.mxu0
        %v551 = vadd.f32 0.0, %v550
        %552 = vmatmul.f32.gmra.mxu0 %v486
        %v553 = vpop.f32.mrf.mxu0
        %v554 = vadd.f32 0.0, %v553
        %555 = vmatmul.f32.gmra.mxu0 %v489
        %v556 = vpop.f32.mrf.mxu0
        %v557 = vadd.f32 0.0, %v556
        %558 = vmatmul.f32.gmra.mxu0 %v492
        %v559 = vpop.f32.mrf.mxu0
        %v560 = vadd.f32 0.0, %v559
        %561 = vmatmul.f32.gmra.mxu0 %v495
        %v562 = vpop.f32.mrf.mxu0
        %v563 = vadd.f32 0.0, %v562
        %564 = vmatmul.f32.gmra.mxu0 %v498
        %v565 = vpop.f32.mrf.mxu0
        %v566 = vadd.f32 0.0, %v565
        %567 = vmatmul.f32.gmra.mxu0 %v501
        %v568 = vpop.f32.mrf.mxu0
        %v569 = vadd.f32 0.0, %v568
        %570 = vdwg.mxu0
        %v572 = vsel %vm454, %v421, 0
        %v575 = vsel %vm454, %v422, 0
        %v578 = vsel %vm454, %v423, 0
        %v581 = vsel %vm454, %v424, 0
        %v584 = vsel %vm454, %v425, 0
        %v587 = vsel %vm454, %v426, 0
        %v590 = vsel %vm454, %v427, 0
        %v593 = vsel %vm454, %v428, 0
        %v596 = vsel %vm454, %v429, 0
        %v599 = vsel %vm454, %v430, 0
        %v602 = vsel %vm454, %v431, 0
        %v605 = vsel %vm454, %v432, 0
        %v608 = vsel %vm454, %v433, 0
        %v611 = vsel %vm454, %v434, 0
        %v614 = vsel %vm454, %v435, 0
        %v617 = vsel %vm454, %v436, 0
        %v620 = vsel %vm503, %v415, 0
        %622 = vmatpush.msra.mxu0 0.0
        %623 = vmatpush.msra.mxu0 0.0
        %624 = vmatpush.msra.mxu0 0.0
        %625 = vmatpush.msra.mxu0 0.0
        %626 = vmatpush.msra.mxu0 0.0
        %627 = vmatpush.msra.mxu0 0.0
        %628 = vmatpush.msra.mxu0 0.0
        %629 = vmatpush.msra.mxu0 0.0
        %630 = vmatpush.msra.mxu0 0.0
        %631 = vmatpush.msra.mxu0 0.0
        %632 = vmatpush.msra.mxu0 0.0
        %633 = vmatpush.msra.mxu0 0.0
        %634 = vmatpush.msra.mxu0 0.0
        %635 = vmatpush.msra.mxu0 0.0
        %636 = vmatpush.msra.mxu0 0.0
        %637 = vmatpush.msra.mxu0 %v620
        %638 = vmatmul.f32.gmra.mxu0 %v572
        %v639 = vpop.f32.mrf.mxu0
        %v640 = vadd.f32 %v524, %v639
        %641 = vmatmul.f32.gmra.mxu0 %v575
        %v642 = vpop.f32.mrf.mxu0
        %v643 = vadd.f32 %v527, %v642
        %644 = vmatmul.f32.gmra.mxu0 %v578
        %v645 = vpop.f32.mrf.mxu0
        %v646 = vadd.f32 %v530, %v645
        %647 = vmatmul.f32.gmra.mxu0 %v581
        %v648 = vpop.f32.mrf.mxu0
        %v649 = vadd.f32 %v533, %v648
        %650 = vmatmul.f32.gmra.mxu0 %v584
        %v651 = vpop.f32.mrf.mxu0
        %v652 = vadd.f32 %v536, %v651
        %653 = vmatmul.f32.gmra.mxu0 %v587
        %v654 = vpop.f32.mrf.mxu0
        %v655 = vadd.f32 %v539, %v654
        %656 = vmatmul.f32.gmra.mxu0 %v590
        %v657 = vpop.f32.mrf.mxu0
        %v658 = vadd.f32 %v542, %v657
        %659 = vmatmul.f32.gmra.mxu0 %v593
        %v660 = vpop.f32.mrf.mxu0
        %v661 = vadd.f32 %v545, %v660
        %662 = vmatmul.f32.gmra.mxu0 %v596
        %v663 = vpop.f32.mrf.mxu0
        %v664 = vadd.f32 %v548, %v663
        %665 = vmatmul.f32.gmra.mxu0 %v599
        %v666 = vpop.f32.mrf.mxu0
        %v667 = vadd.f32 %v551, %v666
        %668 = vmatmul.f32.gmra.mxu0 %v602
        %v669 = vpop.f32.mrf.mxu0
        %v670 = vadd.f32 %v554, %v669
        %671 = vmatmul.f32.gmra.mxu0 %v605
        %v672 = vpop.f32.mrf.mxu0
        %v673 = vadd.f32 %v557, %v672
        %674 = vmatmul.f32.gmra.mxu0 %v608
        %v675 = vpop.f32.mrf.mxu0
        %v676 = vadd.f32 %v560, %v675
        %677 = vmatmul.f32.gmra.mxu0 %v611
        %v678 = vpop.f32.mrf.mxu0
        %v679 = vadd.f32 %v563, %v678
        %680 = vmatmul.f32.gmra.mxu0 %v614
        %v681 = vpop.f32.mrf.mxu0
        %v682 = vadd.f32 %v566, %v681
        %683 = vmatmul.f32.gmra.mxu0 %v617
        %v684 = vpop.f32.mrf.mxu0
        %v685 = vadd.f32 %v569, %v684
        %686 = vdwg.mxu0
        %s687 = scalar_lea.vmem %s2, 256
        %v688 = vld [vmem:[%s687] sm:$0xff]
        %v689 = vld [vmem:[%s687 + $0x8] sm:$0xff]
        %v690 = vld [vmem:[%s687 + $0x10] sm:$0xff]
        %v691 = vld [vmem:[%s687 + $0x18] sm:$0xff]
        %v692 = vld [vmem:[%s687 + $0x20] sm:$0xff]
        %v693 = vld [vmem:[%s687 + $0x28] sm:$0xff]
        %v694 = vld [vmem:[%s687 + $0x30] sm:$0xff]
        %v695 = vld [vmem:[%s687 + $0x38] sm:$0xff]
        %v696 = vld [vmem:[%s687 + $0x40] sm:$0xff]
        %v697 = vld [vmem:[%s687 + $0x48] sm:$0xff]
        %v698 = vld [vmem:[%s687 + $0x50] sm:$0xff]
        %v699 = vld [vmem:[%s687 + $0x58] sm:$0xff]
        %v700 = vld [vmem:[%s687 + $0x60] sm:$0xff]
        %v701 = vld [vmem:[%s687 + $0x68] sm:$0xff]
        %v702 = vld [vmem:[%s687 + $0x70] sm:$0xff]
        %v703 = vld [vmem:[%s687 + $0x78] sm:$0xff]
        %v705 = vsel %vm454, %v688, 0
        %v708 = vsel %vm454, %v689, 0
        %v711 = vsel %vm454, %v690, 0
        %v714 = vsel %vm454, %v691, 0
        %v717 = vsel %vm454, %v692, 0
        %v720 = vsel %vm454, %v693, 0
        %v723 = vsel %vm454, %v694, 0
        %v726 = vsel %vm454, %v695, 0
        %v729 = vsel %vm454, %v696, 0
        %v732 = vsel %vm454, %v697, 0
        %v735 = vsel %vm454, %v698, 0
        %v738 = vsel %vm454, %v699, 0
        %v741 = vsel %vm454, %v700, 0
        %v744 = vsel %vm454, %v701, 0
        %v747 = vsel %vm454, %v702, 0
        %v750 = vsel %vm454, %v703, 0
        %v753 = vsel %vm503, %v420, 0
        %755 = vmatpush.msra.mxu0 0.0
        %756 = vmatpush.msra.mxu0 0.0
        %757 = vmatpush.msra.mxu0 0.0
        %758 = vmatpush.msra.mxu0 0.0
        %759 = vmatpush.msra.mxu0 0.0
        %760 = vmatpush.msra.mxu0 0.0
        %761 = vmatpush.msra.mxu0 0.0
        %762 = vmatpush.msra.mxu0 0.0
        %763 = vmatpush.msra.mxu0 0.0
        %764 = vmatpush.msra.mxu0 0.0
        %765 = vmatpush.msra.mxu0 0.0
        %766 = vmatpush.msra.mxu0 0.0
        %767 = vmatpush.msra.mxu0 0.0
        %768 = vmatpush.msra.mxu0 0.0
        %769 = vmatpush.msra.mxu0 0.0
        %770 = vmatpush.msra.mxu0 %v753
        %771 = vmatmul.f32.gmra.mxu0 %v705
        %v772 = vpop.f32.mrf.mxu0
        %v773 = vadd.f32 0.0, %v772
        %774 = vmatmul.f32.gmra.mxu0 %v708
        %v775 = vpop.f32.mrf.mxu0
        %v776 = vadd.f32 0.0, %v775
        %777 = vmatmul.f32.gmra.mxu0 %v711
        %v778 = vpop.f32.mrf.mxu0
        %v779 = vadd.f32 0.0, %v778
        %780 = vmatmul.f32.gmra.mxu0 %v714
        %v781 = vpop.f32.mrf.mxu0
        %v782 = vadd.f32 0.0, %v781
        %783 = vmatmul.f32.gmra.mxu0 %v717
        %v784 = vpop.f32.mrf.mxu0
        %v785 = vadd.f32 0.0, %v784
        %786 = vmatmul.f32.gmra.mxu0 %v720
        %v787 = vpop.f32.mrf.mxu0
        %v788 = vadd.f32 0.0, %v787
        %789 = vmatmul.f32.gmra.mxu0 %v723
        %v790 = vpop.f32.mrf.mxu0
        %v791 = vadd.f32 0.0, %v790
        %792 = vmatmul.f32.gmra.mxu0 %v726
        %v793 = vpop.f32.mrf.mxu0
        %v794 = vadd.f32 0.0, %v793
        %795 = vmatmul.f32.gmra.mxu0 %v729
        %v796 = vpop.f32.mrf.mxu0
        %v797 = vadd.f32 0.0, %v796
        %798 = vmatmul.f32.gmra.mxu0 %v732
        %v799 = vpop.f32.mrf.mxu0
        %v800 = vadd.f32 0.0, %v799
        %801 = vmatmul.f32.gmra.mxu0 %v735
        %v802 = vpop.f32.mrf.mxu0
        %v803 = vadd.f32 0.0, %v802
        %804 = vmatmul.f32.gmra.mxu0 %v738
        %v805 = vpop.f32.mrf.mxu0
        %v806 = vadd.f32 0.0, %v805
        %807 = vmatmul.f32.gmra.mxu0 %v741
        %v808 = vpop.f32.mrf.mxu0
        %v809 = vadd.f32 0.0, %v808
        %810 = vmatmul.f32.gmra.mxu0 %v744
        %v811 = vpop.f32.mrf.mxu0
        %v812 = vadd.f32 0.0, %v811
        %813 = vmatmul.f32.gmra.mxu0 %v747
        %v814 = vpop.f32.mrf.mxu0
        %v815 = vadd.f32 0.0, %v814
        %816 = vmatmul.f32.gmra.mxu0 %v750
        %v817 = vpop.f32.mrf.mxu0
        %v818 = vadd.f32 0.0, %v817
        %819 = vdwg.mxu0
        %v820 = vadd.f32 %v640, %v773
        %v821 = vadd.f32 %v643, %v776
        %v822 = vadd.f32 %v646, %v779
        %v823 = vadd.f32 %v649, %v782
        %v824 = vadd.f32 %v652, %v785
        %v825 = vadd.f32 %v655, %v788
        %v826 = vadd.f32 %v658, %v791
        %v827 = vadd.f32 %v661, %v794
        %v828 = vadd.f32 %v664, %v797
        %v829 = vadd.f32 %v667, %v800
        %v830 = vadd.f32 %v670, %v803
        %v831 = vadd.f32 %v673, %v806
        %v832 = vadd.f32 %v676, %v809
        %v833 = vadd.f32 %v679, %v812
        %v834 = vadd.f32 %v682, %v815
        %v835 = vadd.f32 %v685, %v818
        %v836 = vld [vmem:[%s3] sm:$0xff]
        %v837 = vld [vmem:[%s3 + $0x8] sm:$0xff]
        %v838 = vld [vmem:[%s3 + $0x10] sm:$0xff]
        %v839 = vld [vmem:[%s3 + $0x18] sm:$0xff]
        %v840 = vld [vmem:[%s3 + $0x20] sm:$0xff]
        %v841 = vld [vmem:[%s3 + $0x28] sm:$0xff]
        %v842 = vld [vmem:[%s3 + $0x30] sm:$0xff]
        %v843 = vld [vmem:[%s3 + $0x38] sm:$0xff]
        %v844 = vld [vmem:[%s3 + $0x40] sm:$0xff]
        %v845 = vld [vmem:[%s3 + $0x48] sm:$0xff]
        %v846 = vld [vmem:[%s3 + $0x50] sm:$0xff]
        %v847 = vld [vmem:[%s3 + $0x58] sm:$0xff]
        %v848 = vld [vmem:[%s3 + $0x60] sm:$0xff]
        %v849 = vld [vmem:[%s3 + $0x68] sm:$0xff]
        %v850 = vld [vmem:[%s3 + $0x70] sm:$0xff]
        %v851 = vld [vmem:[%s3 + $0x78] sm:$0xff]
        %853 = vset.pattern.permute.xlu0 0
        %854 = vperm.xlu0 %853, %v836
        %v855 = vpop.permute.xlu0 %854
        %858 = vset.pattern.permute.xlu0 0
        %859 = vperm.xlu0 %858, %v837
        %v860 = vpop.permute.xlu0 %859
        %863 = vset.pattern.permute.xlu0 0
        %864 = vperm.xlu0 %863, %v838
        %v865 = vpop.permute.xlu0 %864
        %868 = vset.pattern.permute.xlu0 0
        %869 = vperm.xlu0 %868, %v839
        %v870 = vpop.permute.xlu0 %869
        %873 = vset.pattern.permute.xlu0 0
        %874 = vperm.xlu0 %873, %v840
        %v875 = vpop.permute.xlu0 %874
        %878 = vset.pattern.permute.xlu0 0
        %879 = vperm.xlu0 %878, %v841
        %v880 = vpop.permute.xlu0 %879
        %883 = vset.pattern.permute.xlu0 0
        %884 = vperm.xlu0 %883, %v842
        %v885 = vpop.permute.xlu0 %884
        %888 = vset.pattern.permute.xlu0 0
        %889 = vperm.xlu0 %888, %v843
        %v890 = vpop.permute.xlu0 %889
        %893 = vset.pattern.permute.xlu0 0
        %894 = vperm.xlu0 %893, %v844
        %v895 = vpop.permute.xlu0 %894
        %898 = vset.pattern.permute.xlu0 0
        %899 = vperm.xlu0 %898, %v845
        %v900 = vpop.permute.xlu0 %899
        %903 = vset.pattern.permute.xlu0 0
        %904 = vperm.xlu0 %903, %v846
        %v905 = vpop.permute.xlu0 %904
        %908 = vset.pattern.permute.xlu0 0
        %909 = vperm.xlu0 %908, %v847
        %v910 = vpop.permute.xlu0 %909
        %913 = vset.pattern.permute.xlu0 0
        %914 = vperm.xlu0 %913, %v848
        %v915 = vpop.permute.xlu0 %914
        %918 = vset.pattern.permute.xlu0 0
        %919 = vperm.xlu0 %918, %v849
        %v920 = vpop.permute.xlu0 %919
        %923 = vset.pattern.permute.xlu0 0
        %924 = vperm.xlu0 %923, %v850
        %v925 = vpop.permute.xlu0 %924
        %928 = vset.pattern.permute.xlu0 0
        %929 = vperm.xlu0 %928, %v851
        %v930 = vpop.permute.xlu0 %929
        %v932 = vadd.f32 %v820, %v855
        %v933 = vadd.f32 %v821, %v860
        %v934 = vadd.f32 %v822, %v865
        %v935 = vadd.f32 %v823, %v870
        %v936 = vadd.f32 %v824, %v875
        %v937 = vadd.f32 %v825, %v880
        %v938 = vadd.f32 %v826, %v885
        %v939 = vadd.f32 %v827, %v890
        %v940 = vadd.f32 %v828, %v895
        %v941 = vadd.f32 %v829, %v900
        %v942 = vadd.f32 %v830, %v905
        %v943 = vadd.f32 %v831, %v910
        %v944 = vadd.f32 %v832, %v915
        %v945 = vadd.f32 %v833, %v920
        %v946 = vadd.f32 %v834, %v925
        %v947 = vadd.f32 %v835, %v930
        %v948 = vmax.f32 %v932, 0.0
        %v949 = vmax.f32 %v933, 0.0
        %v950 = vmax.f32 %v934, 0.0
        %v951 = vmax.f32 %v935, 0.0
        %v952 = vmax.f32 %v936, 0.0
        %v953 = vmax.f32 %v937, 0.0
        %v954 = vmax.f32 %v938, 0.0
        %v955 = vmax.f32 %v939, 0.0
        %v956 = vmax.f32 %v940, 0.0
        %v957 = vmax.f32 %v941, 0.0
        %v958 = vmax.f32 %v942, 0.0
        %v959 = vmax.f32 %v943, 0.0
        %v960 = vmax.f32 %v944, 0.0
        %v961 = vmax.f32 %v945, 0.0
        %v962 = vmax.f32 %v946, 0.0
        %v963 = vmax.f32 %v947, 0.0
        %v964 = vld [vmem:[%s4] sm:$0xff]
        %v965 = vld [vmem:[%s4 + $0x8] sm:$0xff]
        %v966 = vld [vmem:[%s4 + $0x10] sm:$0xff]
        %v967 = vld [vmem:[%s4 + $0x18] sm:$0xff]
        %v968 = vld [vmem:[%s4 + $0x20] sm:$0xff]
        %v969 = vld [vmem:[%s4 + $0x28] sm:$0xff]
        %v970 = vld [vmem:[%s4 + $0x30] sm:$0xff]
        %v971 = vld [vmem:[%s4 + $0x38] sm:$0xff]
        %v972 = vld [vmem:[%s4 + $0x40] sm:$0xff]
        %v973 = vld [vmem:[%s4 + $0x48] sm:$0xff]
        %v974 = vld [vmem:[%s4 + $0x50] sm:$0xff]
        %v975 = vld [vmem:[%s4 + $0x58] sm:$0xff]
        %v976 = vld [vmem:[%s4 + $0x60] sm:$0xff]
        %v977 = vld [vmem:[%s4 + $0x68] sm:$0xff]
        %v978 = vld [vmem:[%s4 + $0x70] sm:$0xff]
        %v979 = vld [vmem:[%s4 + $0x78] sm:$0xff]
        %v980 = vld [vmem:[%s5] sm:$0xff]
        %v981 = vld [vmem:[%s5 + $0x8] sm:$0xff]
        %v982 = vld [vmem:[%s5 + $0x10] sm:$0xff]
        %v983 = vld [vmem:[%s5 + $0x18] sm:$0xff]
        %v984 = vld [vmem:[%s5 + $0x20] sm:$0xff]
        %v985 = vld [vmem:[%s5 + $0x28] sm:$0xff]
        %v986 = vld [vmem:[%s5 + $0x30] sm:$0xff]
        %v987 = vld [vmem:[%s5 + $0x38] sm:$0xff]
        %v988 = vld [vmem:[%s5 + $0x40] sm:$0xff]
        %v989 = vld [vmem:[%s5 + $0x48] sm:$0xff]
        %v990 = vld [vmem:[%s5 + $0x50] sm:$0xff]
        %v991 = vld [vmem:[%s5 + $0x58] sm:$0xff]
        %v992 = vld [vmem:[%s5 + $0x60] sm:$0xff]
        %v993 = vld [vmem:[%s5 + $0x68] sm:$0xff]
        %v994 = vld [vmem:[%s5 + $0x70] sm:$0xff]
        %v995 = vld [vmem:[%s5 + $0x78] sm:$0xff]
        %997 = vset.pattern.permute.xlu0 0
        %998 = vperm.xlu0 %997, %v980
        %v999 = vpop.permute.xlu0 %998
        %1002 = vset.pattern.permute.xlu0 0
        %1003 = vperm.xlu0 %1002, %v981
        %v1004 = vpop.permute.xlu0 %1003
        %1007 = vset.pattern.permute.xlu0 0
        %1008 = vperm.xlu0 %1007, %v982
        %v1009 = vpop.permute.xlu0 %1008
        %1012 = vset.pattern.permute.xlu0 0
        %1013 = vperm.xlu0 %1012, %v983
        %v1014 = vpop.permute.xlu0 %1013
        %1017 = vset.pattern.permute.xlu0 0
        %1018 = vperm.xlu0 %1017, %v984
        %v1019 = vpop.permute.xlu0 %1018
        %1022 = vset.pattern.permute.xlu0 0
        %1023 = vperm.xlu0 %1022, %v985
        %v1024 = vpop.permute.xlu0 %1023
        %1027 = vset.pattern.permute.xlu0 0
        %1028 = vperm.xlu0 %1027, %v986
        %v1029 = vpop.permute.xlu0 %1028
        %1032 = vset.pattern.permute.xlu0 0
        %1033 = vperm.xlu0 %1032, %v987
        %v1034 = vpop.permute.xlu0 %1033
        %1037 = vset.pattern.permute.xlu0 0
        %1038 = vperm.xlu0 %1037, %v988
        %v1039 = vpop.permute.xlu0 %1038
        %1042 = vset.pattern.permute.xlu0 0
        %1043 = vperm.xlu0 %1042, %v989
        %v1044 = vpop.permute.xlu0 %1043
        %1047 = vset.pattern.permute.xlu0 0
        %1048 = vperm.xlu0 %1047, %v990
        %v1049 = vpop.permute.xlu0 %1048
        %1052 = vset.pattern.permute.xlu0 0
        %1053 = vperm.xlu0 %1052, %v991
        %v1054 = vpop.permute.xlu0 %1053
        %1057 = vset.pattern.permute.xlu0 0
        %1058 = vperm.xlu0 %1057, %v992
        %v1059 = vpop.permute.xlu0 %1058
        %1062 = vset.pattern.permute.xlu0 0
        %1063 = vperm.xlu0 %1062, %v993
        %v1064 = vpop.permute.xlu0 %1063
        %1067 = vset.pattern.permute.xlu0 0
        %1068 = vperm.xlu0 %1067, %v994
        %v1069 = vpop.permute.xlu0 %1068
        %1072 = vset.pattern.permute.xlu0 0
        %1073 = vperm.xlu0 %1072, %v995
        %v1074 = vpop.permute.xlu0 %1073
        %1076 = vmatpush.msra.mxu0 %v963
        %1077 = vmatpush.msra.mxu0 %v962
        %1078 = vmatpush.msra.mxu0 %v961
        %1079 = vmatpush.msra.mxu0 %v960
        %1080 = vmatpush.msra.mxu0 %v959
        %1081 = vmatpush.msra.mxu0 %v958
        %1082 = vmatpush.msra.mxu0 %v957
        %1083 = vmatpush.msra.mxu0 %v956
        %1084 = vmatpush.msra.mxu0 %v955
        %1085 = vmatpush.msra.mxu0 %v954
        %1086 = vmatpush.msra.mxu0 %v953
        %1087 = vmatpush.msra.mxu0 %v952
        %1088 = vmatpush.msra.mxu0 %v951
        %1089 = vmatpush.msra.mxu0 %v950
        %1090 = vmatpush.msra.mxu0 %v949
        %1091 = vmatpush.msra.mxu0 %v948
        %1092 = vmatmul.f32.gmra.mxu0 %v964
        %v1093 = vpop.f32.mrf.mxu0
        %v1094 = vadd.f32 %v999, %v1093
        %1095 = vmatmul.f32.gmra.mxu0 %v965
        %v1096 = vpop.f32.mrf.mxu0
        %v1097 = vadd.f32 %v1004, %v1096
        %1098 = vmatmul.f32.gmra.mxu0 %v966
        %v1099 = vpop.f32.mrf.mxu0
        %v1100 = vadd.f32 %v1009, %v1099
        %1101 = vmatmul.f32.gmra.mxu0 %v967
        %v1102 = vpop.f32.mrf.mxu0
        %v1103 = vadd.f32 %v1014, %v1102
        %1104 = vmatmul.f32.gmra.mxu0 %v968
        %v1105 = vpop.f32.mrf.mxu0
        %v1106 = vadd.f32 %v1019, %v1105
        %1107 = vmatmul.f32.gmra.mxu0 %v969
        %v1108 = vpop.f32.mrf.mxu0
        %v1109 = vadd.f32 %v1024, %v1108
        %1110 = vmatmul.f32.gmra.mxu0 %v970
        %v1111 = vpop.f32.mrf.mxu0
        %v1112 = vadd.f32 %v1029, %v1111
        %1113 = vmatmul.f32.gmra.mxu0 %v971
        %v1114 = vpop.f32.mrf.mxu0
        %v1115 = vadd.f32 %v1034, %v1114
        %1116 = vmatmul.f32.gmra.mxu0 %v972
        %v1117 = vpop.f32.mrf.mxu0
        %v1118 = vadd.f32 %v1039, %v1117
        %1119 = vmatmul.f32.gmra.mxu0 %v973
        %v1120 = vpop.f32.mrf.mxu0
        %v1121 = vadd.f32 %v1044, %v1120
        %1122 = vmatmul.f32.gmra.mxu0 %v974
        %v1123 = vpop.f32.mrf.mxu0
        %v1124 = vadd.f32 %v1049, %v1123
        %1125 = vmatmul.f32.gmra.mxu0 %v975
        %v1126 = vpop.f32.mrf.mxu0
        %v1127 = vadd.f32 %v1054, %v1126
        %1128 = vmatmul.f32.gmra.mxu0 %v976
        %v1129 = vpop.f32.mrf.mxu0
        %v1130 = vadd.f32 %v1059, %v1129
        %1131 = vmatmul.f32.gmra.mxu0 %v977
        %v1132 = vpop.f32.mrf.mxu0
        %v1133 = vadd.f32 %v1064, %v1132
        %1134 = vmatmul.f32.gmra.mxu0 %v978
        %v1135 = vpop.f32.mrf.mxu0
        %v1136 = vadd.f32 %v1069, %v1135
        %1137 = vmatmul.f32.gmra.mxu0 %v979
        %v1138 = vpop.f32.mrf.mxu0
        %v1139 = vadd.f32 %v1074, %v1138
        %1140 = vdwg.mxu0
        %v1141 = vmax.f32 %v1094, 0.0
        %v1142 = vmax.f32 %v1097, 0.0
        %v1143 = vmax.f32 %v1100, 0.0
        %v1144 = vmax.f32 %v1103, 0.0
        %v1145 = vmax.f32 %v1106, 0.0
        %v1146 = vmax.f32 %v1109, 0.0
        %v1147 = vmax.f32 %v1112, 0.0
        %v1148 = vmax.f32 %v1115, 0.0
        %v1149 = vmax.f32 %v1118, 0.0
        %v1150 = vmax.f32 %v1121, 0.0
        %v1151 = vmax.f32 %v1124, 0.0
        %v1152 = vmax.f32 %v1127, 0.0
        %v1153 = vmax.f32 %v1130, 0.0
        %v1154 = vmax.f32 %v1133, 0.0
        %v1155 = vmax.f32 %v1136, 0.0
        %v1156 = vmax.f32 %v1139, 0.0
        %1173 = vrot.lane.b32.xlu0 %v1141, 1
        %v1174 = vpop.permute.xlu0 %1173
        %1175 = vrot.lane.b32.xlu0 %v1142, 1
        %v1176 = vpop.permute.xlu0 %1175
        %1177 = vrot.lane.b32.xlu0 %v1143, 1
        %v1178 = vpop.permute.xlu0 %1177
        %1179 = vrot.lane.b32.xlu0 %v1144, 1
        %v1180 = vpop.permute.xlu0 %1179
        %1181 = vrot.lane.b32.xlu0 %v1145, 1
        %v1182 = vpop.permute.xlu0 %1181
        %1183 = vrot.lane.b32.xlu0 %v1146, 1
        %v1184 = vpop.permute.xlu0 %1183
        %1185 = vrot.lane.b32.xlu0 %v1147, 1
        %v1186 = vpop.permute.xlu0 %1185
        %1187 = vrot.lane.b32.xlu0 %v1148, 1
        %v1188 = vpop.permute.xlu0 %1187
        %1189 = vrot.lane.b32.xlu0 %v1149, 1
        %v1190 = vpop.permute.xlu0 %1189
        %1191 = vrot.lane.b32.xlu0 %v1150, 1
        %v1192 = vpop.permute.xlu0 %1191
        %1193 = vrot.lane.b32.xlu0 %v1151, 1
        %v1194 = vpop.permute.xlu0 %1193
        %1195 = vrot.lane.b32.xlu0 %v1152, 1
        %v1196 = vpop.permute.xlu0 %1195
        %1197 = vrot.lane.b32.xlu0 %v1153, 1
        %v1198 = vpop.permute.xlu0 %1197
        %1199 = vrot.lane.b32.xlu0 %v1154, 1
        %v1200 = vpop.permute.xlu0 %1199
        %1201 = vrot.lane.b32.xlu0 %v1155, 1
        %v1202 = vpop.permute.xlu0 %1201
        %1203 = vrot.lane.b32.xlu0 %v1156, 1
        %v1204 = vpop.permute.xlu0 %1203
        %v1221 = vsel %vm414, 0.0, %v1174
        %v1222 = vsel %vm414, 0.0, %v1176
        %v1223 = vsel %vm414, 0.0, %v1178
        %v1224 = vsel %vm414, 0.0, %v1180
        %v1225 = vsel %vm414, 0.0, %v1182
        %v1226 = vsel %vm414, 0.0, %v1184
        %v1227 = vsel %vm414, 0.0, %v1186
        %v1228 = vsel %vm414, 0.0, %v1188
        %v1229 = vsel %vm414, 0.0, %v1190
        %v1230 = vsel %vm414, 0.0, %v1192
        %v1231 = vsel %vm414, 0.0, %v1194
        %v1232 = vsel %vm414, 0.0, %v1196
        %v1233 = vsel %vm414, 0.0, %v1198
        %v1234 = vsel %vm414, 0.0, %v1200
        %v1235 = vsel %vm414, 0.0, %v1202
        %v1236 = vsel %vm414, 0.0, %v1204
        %1237 = vrot.lane.b32.xlu0 %v1141, 127
        %v1238 = vpop.permute.xlu0 %1237
        %1239 = vrot.lane.b32.xlu0 %v1142, 127
        %v1240 = vpop.permute.xlu0 %1239
        %1241 = vrot.lane.b32.xlu0 %v1143, 127
        %v1242 = vpop.permute.xlu0 %1241
        %1243 = vrot.lane.b32.xlu0 %v1144, 127
        %v1244 = vpop.permute.xlu0 %1243
        %1245 = vrot.lane.b32.xlu0 %v1145, 127
        %v1246 = vpop.permute.xlu0 %1245
        %1247 = vrot.lane.b32.xlu0 %v1146, 127
        %v1248 = vpop.permute.xlu0 %1247
        %1249 = vrot.lane.b32.xlu0 %v1147, 127
        %v1250 = vpop.permute.xlu0 %1249
        %1251 = vrot.lane.b32.xlu0 %v1148, 127
        %v1252 = vpop.permute.xlu0 %1251
        %1253 = vrot.lane.b32.xlu0 %v1149, 127
        %v1254 = vpop.permute.xlu0 %1253
        %1255 = vrot.lane.b32.xlu0 %v1150, 127
        %v1256 = vpop.permute.xlu0 %1255
        %1257 = vrot.lane.b32.xlu0 %v1151, 127
        %v1258 = vpop.permute.xlu0 %1257
        %1259 = vrot.lane.b32.xlu0 %v1152, 127
        %v1260 = vpop.permute.xlu0 %1259
        %1261 = vrot.lane.b32.xlu0 %v1153, 127
        %v1262 = vpop.permute.xlu0 %1261
        %1263 = vrot.lane.b32.xlu0 %v1154, 127
        %v1264 = vpop.permute.xlu0 %1263
        %1265 = vrot.lane.b32.xlu0 %v1155, 127
        %v1266 = vpop.permute.xlu0 %1265
        %1267 = vrot.lane.b32.xlu0 %v1156, 127
        %v1268 = vpop.permute.xlu0 %1267
        %v1285 = vsel %vm419, %v1238, 0.0
        %v1286 = vsel %vm419, %v1240, 0.0
        %v1287 = vsel %vm419, %v1242, 0.0
        %v1288 = vsel %vm419, %v1244, 0.0
        %v1289 = vsel %vm419, %v1246, 0.0
        %v1290 = vsel %vm419, %v1248, 0.0
        %v1291 = vsel %vm419, %v1250, 0.0
        %v1292 = vsel %vm419, %v1252, 0.0
        %v1293 = vsel %vm419, %v1254, 0.0
        %v1294 = vsel %vm419, %v1256, 0.0
        %v1295 = vsel %vm419, %v1258, 0.0
        %v1296 = vsel %vm419, %v1260, 0.0
        %v1297 = vsel %vm419, %v1262, 0.0
        %v1298 = vsel %vm419, %v1264, 0.0
        %v1299 = vsel %vm419, %v1266, 0.0
        %v1300 = vsel %vm419, %v1268, 0.0
        %v1301 = vld [vmem:[%s6] sm:$0xf]
        %s1302 = scalar_lea.vmem %s6, 4
        %v1303 = vld [vmem:[%s1302] sm:$0xf]
        %1304 = vmatpush.msra.mxu0 %v1156
        %1305 = vmatpush.msra.mxu0 %v1155
        %1306 = vmatpush.msra.mxu0 %v1154
        %1307 = vmatpush.msra.mxu0 %v1153
        %1308 = vmatpush.msra.mxu0 %v1152
        %1309 = vmatpush.msra.mxu0 %v1151
        %1310 = vmatpush.msra.mxu0 %v1150
        %1311 = vmatpush.msra.mxu0 %v1149
        %1312 = vmatpush.msra.mxu0 %v1148
        %1313 = vmatpush.msra.mxu0 %v1147
        %1314 = vmatpush.msra.mxu0 %v1146
        %1315 = vmatpush.msra.mxu0 %v1145
        %1316 = vmatpush.msra.mxu0 %v1144
        %1317 = vmatpush.msra.mxu0 %v1143
        %1318 = vmatpush.msra.mxu0 %v1142
        %1319 = vmatpush.msra.mxu0 %v1141
        %1320 = vmatmul.f32.gmra.mxu0 %v1303
        %v1321 = vpop.f32.mrf.mxu0
        %v1322 = vadd.f32 0.0, %v1321
        %1323 = vdwg.mxu0
        %1324 = vmatpush.msra.mxu0 %v1236
        %1325 = vmatpush.msra.mxu0 %v1235
        %1326 = vmatpush.msra.mxu0 %v1234
        %1327 = vmatpush.msra.mxu0 %v1233
        %1328 = vmatpush.msra.mxu0 %v1232
        %1329 = vmatpush.msra.mxu0 %v1231
        %1330 = vmatpush.msra.mxu0 %v1230
        %1331 = vmatpush.msra.mxu0 %v1229
        %1332 = vmatpush.msra.mxu0 %v1228
        %1333 = vmatpush.msra.mxu0 %v1227
        %1334 = vmatpush.msra.mxu0 %v1226
        %1335 = vmatpush.msra.mxu0 %v1225
        %1336 = vmatpush.msra.mxu0 %v1224
        %1337 = vmatpush.msra.mxu0 %v1223
        %1338 = vmatpush.msra.mxu0 %v1222
        %1339 = vmatpush.msra.mxu0 %v1221
        %1340 = vmatmul.f32.gmra.mxu0 %v1301
        %v1341 = vpop.f32.mrf.mxu0
        %v1342 = vadd.f32 %v1322, %v1341
        %1343 = vdwg.mxu0
        %s1344 = scalar_lea.vmem %s6, 8
        %v1345 = vld [vmem:[%s1344] sm:$0xf]
        %1346 = vmatpush.msra.mxu0 %v1300
        %1347 = vmatpush.msra.mxu0 %v1299
        %1348 = vmatpush.msra.mxu0 %v1298
        %1349 = vmatpush.msra.mxu0 %v1297
        %1350 = vmatpush.msra.mxu0 %v1296
        %1351 = vmatpush.msra.mxu0 %v1295
        %1352 = vmatpush.msra.mxu0 %v1294
        %1353 = vmatpush.msra.mxu0 %v1293
        %1354 = vmatpush.msra.mxu0 %v1292
        %1355 = vmatpush.msra.mxu0 %v1291
        %1356 = vmatpush.msra.mxu0 %v1290
        %1357 = vmatpush.msra.mxu0 %v1289
        %1358 = vmatpush.msra.mxu0 %v1288
        %1359 = vmatpush.msra.mxu0 %v1287
        %1360 = vmatpush.msra.mxu0 %v1286
        %1361 = vmatpush.msra.mxu0 %v1285
        %1362 = vmatmul.f32.gmra.mxu0 %v1345
        %v1363 = vpop.f32.mrf.mxu0
        %v1364 = vadd.f32 0.0, %v1363
        %1365 = vdwg.mxu0
        %v1366 = vadd.f32 %v1342, %v1364
        %v1367 = vld [vmem:[%s8] sm:$0xf]
        %1369 = vset.pattern.permute.xlu0 0
        %1370 = vperm.xlu0 %1369, %v1367
        %v1371 = vpop.permute.xlu0 %1370
        %v1373 = vadd.f32 %v1366, %v1371
        %v1374 = vld [vmem:[%s7] sm:$0xf]
        %s1375 = scalar_lea.vmem %s7, 4
        %v1376 = vld [vmem:[%s1375] sm:$0xf]
        %1377 = vmatpush.msra.mxu0 %v1156
        %1378 = vmatpush.msra.mxu0 %v1155
        %1379 = vmatpush.msra.mxu0 %v1154
        %1380 = vmatpush.msra.mxu0 %v1153
        %1381 = vmatpush.msra.mxu0 %v1152
        %1382 = vmatpush.msra.mxu0 %v1151
        %1383 = vmatpush.msra.mxu0 %v1150
        %1384 = vmatpush.msra.mxu0 %v1149
        %1385 = vmatpush.msra.mxu0 %v1148
        %1386 = vmatpush.msra.mxu0 %v1147
        %1387 = vmatpush.msra.mxu0 %v1146
        %1388 = vmatpush.msra.mxu0 %v1145
        %1389 = vmatpush.msra.mxu0 %v1144
        %1390 = vmatpush.msra.mxu0 %v1143
        %1391 = vmatpush.msra.mxu0 %v1142
        %1392 = vmatpush.msra.mxu0 %v1141
        %1393 = vmatmul.f32.gmra.mxu0 %v1376
        %v1394 = vpop.f32.mrf.mxu0
        %v1395 = vadd.f32 0.0, %v1394
        %1396 = vdwg.mxu0
        %1397 = vmatpush.msra.mxu0 %v1236
        %1398 = vmatpush.msra.mxu0 %v1235
        %1399 = vmatpush.msra.mxu0 %v1234
        %1400 = vmatpush.msra.mxu0 %v1233
        %1401 = vmatpush.msra.mxu0 %v1232
        %1402 = vmatpush.msra.mxu0 %v1231
        %1403 = vmatpush.msra.mxu0 %v1230
        %1404 = vmatpush.msra.mxu0 %v1229
        %1405 = vmatpush.msra.mxu0 %v1228
        %1406 = vmatpush.msra.mxu0 %v1227
        %1407 = vmatpush.msra.mxu0 %v1226
        %1408 = vmatpush.msra.mxu0 %v1225
        %1409 = vmatpush.msra.mxu0 %v1224
        %1410 = vmatpush.msra.mxu0 %v1223
        %1411 = vmatpush.msra.mxu0 %v1222
        %1412 = vmatpush.msra.mxu0 %v1221
        %1413 = vmatmul.f32.gmra.mxu0 %v1374
        %v1414 = vpop.f32.mrf.mxu0
        %v1415 = vadd.f32 %v1395, %v1414
        %1416 = vdwg.mxu0
        %s1417 = scalar_lea.vmem %s7, 8
        %v1418 = vld [vmem:[%s1417] sm:$0xf]
        %1419 = vmatpush.msra.mxu0 %v1300
        %1420 = vmatpush.msra.mxu0 %v1299
        %1421 = vmatpush.msra.mxu0 %v1298
        %1422 = vmatpush.msra.mxu0 %v1297
        %1423 = vmatpush.msra.mxu0 %v1296
        %1424 = vmatpush.msra.mxu0 %v1295
        %1425 = vmatpush.msra.mxu0 %v1294
        %1426 = vmatpush.msra.mxu0 %v1293
        %1427 = vmatpush.msra.mxu0 %v1292
        %1428 = vmatpush.msra.mxu0 %v1291
        %1429 = vmatpush.msra.mxu0 %v1290
        %1430 = vmatpush.msra.mxu0 %v1289
        %1431 = vmatpush.msra.mxu0 %v1288
        %1432 = vmatpush.msra.mxu0 %v1287
        %1433 = vmatpush.msra.mxu0 %v1286
        %1434 = vmatpush.msra.mxu0 %v1285
        %1435 = vmatmul.f32.gmra.mxu0 %v1418
        %v1436 = vpop.f32.mrf.mxu0
        %v1437 = vadd.f32 0.0, %v1436
        %1438 = vdwg.mxu0
        %v1439 = vadd.f32 %v1415, %v1437
        %v1440 = vld [vmem:[%s9] sm:$0xf]
        %1442 = vset.pattern.permute.xlu0 0
        %1443 = vperm.xlu0 %1442, %v1440
        %v1444 = vpop.permute.xlu0 %1443
        %v1446 = vadd.f32 %v1439, %v1444
        %v1447 = vadd.f32 %v1373, 2.0
        %v1448 = vsub.f32 0.0, %v1447
        %v1449 = vmul.f32 %v1448, 1.442695
        %v1450 = vpow.pop %v1449
        %v1451 = vadd.f32 %v1450, 1.0
        %v1452 = vrcp.pop %v1451
        %v1453 = vmul.f32 %v1451, %v1452
        %v1454 = vsub.f32 1.0, %v1453
        %v1455 = vmul.f32 %v1452, %v1454
        %v1456 = vadd.f32 %v1452, %v1455
        %vm1457 = vweird.f32 %v1451
        %vm1458 = vweird.f32 %v1452
        %vm1459 = vmor %vm1457, %vm1458
        %v1460 = vsel %vm1459, %v1452, %v1456
        %v1461 = vand.u32 2147483647, %v1451
        %vm1462 = vcmp.eq.f32.partialorder %v1461, 8.507059e+37
        %v1463 = vand.u32 %v1451, 2147483648
        %v1464 = vor.u32 1.1754944e-38, %v1463
        %v1465 = vsel %vm1462, %v1464, %v1460
        %v1466 = vmul.f32 1.0, %v1465
        %v1467 = vld [vmem:[%s408] sm:$0xf]
        %v1468 = vadd.f32 %v1467, %v1446
        %v1469 = vmul.f32 %v1468, %v1466
        %vm1470 = vcmask 125952
        %1471 = vst.msk [vmem:[%s394] sm:$0xf] %vm1470, %v1469
        %v1472 = vlog2.pop %v1451
        %v1473 = vmul.f32 %v1472, 0.6931472
        %v1474 = vsel %vm1470, %v1473, 0.0
        %1475 = vadd.xlane.f32.xlu0 %v1474
        %v1476 = vpop.xlane.xlu0 %1475
        %v1477 = vrot.slane %v1476, 4
        %v1478 = vadd.f32 %v1476, %v1477
        %v1479 = vrot.slane %v1478, 2
        %v1480 = vadd.f32 %v1478, %v1479
        %v1481 = vrot.slane %v1480, 1
        %v1482 = vadd.f32 %v1480, %v1481
        %s1483 = vtos %v1482
        %s1484 = ssub.f32 0.0, %s1483
        %v1485 = vstv %s1484
        %1486 = vst [vmem:[%s400] sm:$0x1] %v1485
        %s1487 = sand.u32 %s257, 1
        %s1488 = scalar_lea.sflag [#allocation3], %s1487
        %s1489 = sand.u32 %s257, 1
        %s1490 = smul.addr %s1489, 4
        %s1491 = scalar_lea.vmem [#allocation2], %s1490
        %s1492 = sand.u32 %s283, 1
        %s1493 = scalar_lea.sflag [#allocation5], %s1492
        %s1494 = sand.u32 %s283, 1
        %s1495 = scalar_lea.vmem [#allocation4], %s1494
        // Predicated region
        $region61: #{tpu_custom_call.1} parent=59 // pred_check
          %p1496 = pneg %p267
        $region62: #{tpu_custom_call.1} parent=59 // pred_check_branch
          %1498 = sbr.rel (%p1496) target = $region64
        $region63: #{tpu_custom_call.1} parent=59 // pred_region
          %1500 = vsyncadd %s1488, 0
          %s1501 = smul.addr %s29, 4
          %s1502 = scalar_lea.hbm %s10, %s1501
          %s1504 = sshll.u32 %s1491, 4
          %s1505 = int_to_ptr.vmem [resolvable:$true] %s1504
          %s1506 = sshll.u32 %s1502, 4
          %s1507 = int_to_ptr.hbm [resolvable:$true] %s1506
          %1509 = dma.vmem_to_hbm [thread:$0]  %s1505, 64, %s1507, %s1488
        $region64: #{tpu_custom_call.1} parent=59 // pred_fallthru
          _
        // Predicated region
        $region65: #{tpu_custom_call.1} parent=59 // pred_check
          %p1510 = pneg %p293
        $region66: #{tpu_custom_call.1} parent=59 // pred_check_branch
          %1512 = sbr.rel (%p1510) target = $region68
        $region67: #{tpu_custom_call.1} parent=59 // pred_region
          %1514 = vsyncadd %s1493, 0
          %s1515 = scalar_lea.hbm %s11, %s29
          %s1517 = sshll.u32 %s1495, 4
          %s1518 = int_to_ptr.vmem [resolvable:$true] %s1517
          %s1519 = sshll.u32 %s1515, 4
          %s1520 = int_to_ptr.hbm [resolvable:$true] %s1519
          %1522 = dma.vmem_to_hbm [thread:$0]  %s1518, 16, %s1520, %s1493
        $region68: #{tpu_custom_call.1} parent=59 // pred_fallthru
          _
      $region60: #{tpu_custom_call.1} parent=5 // pred_fallthru
        _
      %p1523 = scmp.le.s32.totalorder 2, %s24
      // Predicated region
      $region69: #{tpu_custom_call.1} parent=5 // pred_check
        %p1524 = pneg %p1523
      $region70: #{tpu_custom_call.1} parent=5 // pred_check_branch
        %1526 = sbr.rel (%p1524) target = $region72
      $region71: #{tpu_custom_call.1} parent=5 // pred_region
        %s1527 = ssub.s32 %s24, 2
        // Predicated region
        $region73: #{tpu_custom_call.1} parent=71 // pred_check
          %p1528 = pneg %p273
        $region74: #{tpu_custom_call.1} parent=71 // pred_check_branch
          %1530 = sbr.rel (%p1528) target = $region76
        $region75: #{tpu_custom_call.1} parent=71 // pred_region
          %s1531 = sand.u32 %s258, 1
          %s1532 = scalar_lea.sflag [#allocation3], %s1531
          %s1533 = sand.u32 %s258, 1
          %s1534 = smul.addr %s1533, 4
          %s1535 = scalar_lea.vmem [#allocation2], %s1534
          %1537 = dma.done %s1532, 64
        $region76: #{tpu_custom_call.1} parent=71 // pred_fallthru
          _
        // Predicated region
        $region77: #{tpu_custom_call.1} parent=71 // pred_check
          %p1538 = pneg %p299
        $region78: #{tpu_custom_call.1} parent=71 // pred_check_branch
          %1540 = sbr.rel (%p1538) target = $region80
        $region79: #{tpu_custom_call.1} parent=71 // pred_region
          %s1541 = sand.u32 %s284, 1
          %s1542 = scalar_lea.sflag [#allocation5], %s1541
          %s1543 = sand.u32 %s284, 1
          %s1544 = scalar_lea.vmem [#allocation4], %s1543
          %1546 = dma.done %s1542, 16
        $region80: #{tpu_custom_call.1} parent=71 // pred_fallthru
          _
      $region72: #{tpu_custom_call.1} parent=5 // pred_fallthru
        _
    $region6: #{tpu_custom_call.1} parent=1 // loop_footer
      %s28 = sadd.s32 1, %s24
    $region7: #{tpu_custom_call.1} parent=1 // loop_footer_branch
      %23 = sbr.rel target = $region3
    $region8: #{tpu_custom_call.1} parent=1 // loop_exit
      _
    %1547 = vsyncpa [#allocation3], 1
    %s1548 = scalar_lea.sflag [#allocation3], 1
    %1549 = vsyncpa %s1548, 1
    %1550 = vsyncpa [#allocation5], 1
    %s1551 = scalar_lea.sflag [#allocation5], 1
    %1552 = vsyncpa %s1551, 1

</llo_original>
